<compile_context>
chip_gen: v5e
topology: v5e:2x2
jax: 0.10.0
libtpu: 0.0.40
codegen_flags: <defaults>
</compile_context>

<pallas_src>
import functools

import jax
import jax.numpy as jnp
from jax.experimental import pallas as pl
from jax.experimental.pallas import tpu as pltpu


def _round_up(x, m):
    return (x + m - 1) // m * m


def _full_spec(shape):
    return pl.BlockSpec(shape, lambda: (0,) * len(shape))


def _vmem_limit_bytes():
    # v5e/v6e: 128 MiB physical -> ~100 MiB; v7x: 64 MiB physical -> ~52 MiB.
    try:
        cap = int(pltpu.get_tpu_info().vmem_capacity_bytes)
        return int(min(100 << 20, max(32 << 20, cap - (12 << 20))))
    except Exception:
        return 64 << 20


# ----------------------------- fused Pallas kernel ------------------------- #

def _fused_gcn_rocket_kernel(at_ref, dinv_ref, xt_ref, w1t_ref, wst_ref, b_ref,
                             mask_ref, invc_ref,
                             maxt_ref, ppv_ref,
                             h_slab,
                             *, apply_tanh, hidden, b_pad):
    """4x GCNConv (+optional tanh) + global max / ppv pooling, all in VMEM.

    Everything is kept in the transposed (channels, nodes) orientation so the
    node dimension lands on the MXU output-lane axis.
    """
    H = hidden
    at = at_ref[...]                     # (Np, Np) bf16, unnormalized (A+I)^T
    dinv = dinv_ref[...]                 # (1, Np)  f32,  D^-1/2 per node
    h_prev = xt_ref[...]                 # (Fp, Np) bf16, x transposed

    for l in range(4):
        wt = w1t_ref[...] if l == 0 else wst_ref[l - 1]           # (H, Fp|H) bf16
        # (W^T h_prev^T): output lanes = Np, f32 MXU accumulation.
        xw = jnp.dot(wt, h_prev, preferred_element_type=jnp.float32)   # (H, Np)
        xw = xw * dinv                                            # right D^-1/2
        h = jnp.dot(xw.astype(jnp.bfloat16), at,
                    preferred_element_type=jnp.float32)           # (H, Np)
        h = h * dinv + b_ref[:, l:l + 1]                          # left D^-1/2 + bias
        if apply_tanh:
            h = jnp.tanh(h)                                       # EUP slot
        h_bf = h.astype(jnp.bfloat16)
        h_slab[l * H:(l + 1) * H, :] = h_bf                       # bf16 slab row block
        h_prev = h_bf

    hs = h_slab[...]                                              # (4H, Np) bf16
    mask = mask_ref[...]                                          # (Bp, Np) bf16 {0,1}

    # PPV: global_mean_pool((h > 0).float(), batch).  One bf16 MXU matmul with
    # f32 accumulation; output is a lane-dense (Bp, 4H) store.
    pos = (hs > 0).astype(jnp.bfloat16)                           # (4H, Np)
    ppv = jax.lax.dot_general(mask, pos, (((1,), (1,)), ((), ())),
                              preferred_element_type=jnp.float32)  # (Bp, 4H)
    ppv_ref[...] = ppv * invc_ref[...]

    # MAX: global_max_pool(h, batch).  Per-graph masked lane-reduce; large
    # finite sentinel (not -inf) so padded graphs stay finite.
    sent = jnp.asarray(float(jnp.finfo(jnp.bfloat16).min), dtype=jnp.bfloat16)
    for g in range(b_pad):
        sel = mask[g, :][None, :] > 0                             # (1, Np)
        col = jnp.max(jnp.where(sel, hs, sent), axis=1, keepdims=True)   # (4H, 1)
        maxt_ref[:, g:g + 1] = col.astype(jnp.float32)


def fused_gcn_rocket(at_bf16, dinv, xt_bf16, w1t, wstack, bstack, mask, inv_cnt,
                     apply_tanh, hidden):
    n_pad = at_bf16.shape[0]
    b_pad = mask.shape[0]
    k = 4 * hidden

    kernel = functools.partial(_fused_gcn_rocket_kernel,
                               apply_tanh=apply_tanh, hidden=hidden, b_pad=b_pad)
    return pl.pallas_call(
        kernel,
        out_shape=(jax.ShapeDtypeStruct((k, b_pad), jnp.float32),   # max pool^T
                   jax.ShapeDtypeStruct((b_pad, k), jnp.float32)),  # ppv pool
        in_specs=[
            _full_spec(at_bf16.shape),       # (A+I)^T, bf16, resident for all layers
            _full_spec(dinv.shape),          # (1, Np) f32
            _full_spec(xt_bf16.shape),       # (Fp, Np) bf16
            _full_spec(w1t.shape),           # (H, Fp) bf16
            _full_spec(wstack.shape),        # (3, H, H) bf16
            _full_spec(bstack.shape),        # (H, 4) f32
            _full_spec(mask.shape),          # (Bp, Np) bf16
            _full_spec(inv_cnt.shape),       # (Bp, 1) f32
        ],
        out_specs=(_full_spec((k, b_pad)), _full_spec((b_pad, k))),
        scratch_shapes=[pltpu.VMEM((k, n_pad), jnp.bfloat16)],      # bf16 h slab
        compiler_params=pltpu.CompilerParams(
            vmem_limit_bytes=_vmem_limit_bytes()),
    )(at_bf16, dinv, xt_bf16, w1t, wstack, bstack, mask, inv_cnt)


# ------------------------------ JAX glue ----------------------------------- #

def init_params(key, n_feat, hidden_dim, theta=1.0):
    keys = jax.random.split(key, 6)
    params = {}

    # torch_geometric Linear(n_feat, hidden) -- part of the module, but its
    # output x_l is never consumed in forward(), so it is never evaluated.
    lin_bound = 1.0 / jnp.sqrt(jnp.float32(n_feat))
    params["w_lin"] = jax.random.uniform(
        keys[0], (n_feat, hidden_dim), jnp.float32, -lin_bound, lin_bound)
    params["b_lin"] = jax.random.uniform(
        keys[1], (hidden_dim,), jnp.float32, -lin_bound, lin_bound)

    def xavier(k, fan_in, fan_out):
        bound = theta * jnp.sqrt(6.0 / (fan_in + fan_out))
        return jax.random.uniform(k, (fan_in, fan_out), jnp.float32, -bound, bound)

    dims = [(n_feat, hidden_dim)] + [(hidden_dim, hidden_dim)] * 3
    for i, (fi, fo) in enumerate(dims, start=1):
        params[f"w{i}"] = xavier(keys[1 + i], fi, fo)       # stored as (in, out)
        params[f"b{i}"] = jnp.zeros((fo,), jnp.float32)     # GCNConv bias init = 0
    return params


@functools.partial(jax.jit, static_argnames=("num_graphs", "out", "act"))
def untrained_gcn_forward(params, x, edge_index, batch, num_graphs,
                          out="ROCKET", act=None):
    n, f_in = x.shape
    hidden = params["w1"].shape[1]
    apply_tanh = (act == "TANH")

    n_pad = _round_up(max(n, 1), 128)        # lane dim: multiple of 128
    f_pad = _round_up(max(f_in, 1), 16)      # bf16 sublane packing
    b_pad = _round_up(max(num_graphs, 1), 8)

    src = edge_index[0]
    dst = edge_index[1]
    idx = jnp.arange(n)

    # Unnormalized (A + I)^T built DIRECTLY at padded size in bf16 (one scatter;
    # no f32 N^2 materialization, no extra pad copy).  Convention matches PyG
    # gcn_norm (source->target): A[dst, src] += 1  =>  (A+I)^T[src, dst] += 1.
    at = jnp.zeros((n_pad, n_pad), jnp.bfloat16)
    at = at.at[src, dst].add(1.0)
    at = at.at[idx, idx].add(1.0)                      # self loops (real nodes only)

    # Degrees (in-degree + self loop) via an O(E) scatter; D^-1/2 stays f32 and
    # is folded into the kernel (padded nodes get dinv = 0).
    deg = jnp.zeros((n_pad,), jnp.float32).at[dst].add(1.0).at[idx].add(1.0)
    dinv = jnp.where(deg > 0, jax.lax.rsqrt(deg), 0.0).reshape(1, n_pad)

    # Node features, transposed & padded: (f_pad, n_pad) bf16.
    xt = jnp.zeros((f_pad, n_pad), jnp.bfloat16).at[:f_in, :n].set(
        x.T.astype(jnp.bfloat16))

    # Graph-membership mask (bf16 0/1, exact) and 1/|graph|.
    batch_p = jnp.full((n_pad,), -1, jnp.int32).at[:n].set(batch.astype(jnp.int32))
    mask = (jnp.arange(b_pad, dtype=jnp.int32)[:, None] == batch_p[None, :]
            ).astype(jnp.bfloat16)                                  # (b_pad, n_pad)
    counts = jnp.zeros((b_pad,), jnp.float32).at[batch].add(1.0).reshape(b_pad, 1)
    inv_cnt = jnp.where(counts > 0, 1.0 / counts, 0.0)

    # Packed parameters (transposed): w1^T padded along its K dim, w2..4^T
    # stacked, biases as one (hidden, 4) slab.
    w1t = jnp.zeros((hidden, f_pad), jnp.bfloat16).at[:, :f_in].set(
        params["w1"].T.astype(jnp.bfloat16))
    wstack = jnp.stack([params["w2"].T, params["w3"].T, params["w4"].T]
                       ).astype(jnp.bfloat16)                       # (3, H, H)
    bstack = jnp.stack([params["b1"], params["b2"], params["b3"], params["b4"]],
                       axis=1).astype(jnp.float32)                  # (H, 4)

    # NOTE: torch forward computes x_l = self.lin(x) but never uses it; that
    # dead matmul is intentionally skipped.
    maxt, ppv = fused_gcn_rocket(at, dinv, xt, w1t, wstack, bstack, mask,
                                 inv_cnt, apply_tanh, hidden)

    h_max = maxt.T[:num_graphs]          # (B, 4H)   (tiny transpose in XLA)
    h_ppv = ppv[:num_graphs]             # (B, 4H)

    if out == "ROCKET":
        return jnp.concatenate([h_max, h_ppv], axis=1)              # (B, 8*hidden)
    elif out == "MAX":
        return h_max
    elif out == "PPV":
        return h_ppv
    else:
        raise ValueError("ERROR! Unrecognized network output selection")


# ------------------------- pure-JAX f32 reference -------------------------- #

def _reference_forward(params, x, edge_index, batch, num_graphs, act=None):
    n = x.shape[0]
    src, dst = edge_index[0], edge_index[1]
    a = (jnp.zeros((n, n), jnp.float32).at[dst, src].add(1.0)
         + jnp.eye(n, dtype=jnp.float32))
    deg = a.sum(axis=1)
    dinv = jnp.where(deg > 0, 1.0 / jnp.sqrt(deg), 0.0)
    a_hat = dinv[:, None] * a * dinv[None, :]
    h_prev = x
    hs = []
    for i in range(1, 5):
        h = a_hat @ (h_prev @ params[f"w{i}"]) + params[f"b{i}"]
        if act == "TANH":
            h = jnp.tanh(h)
        hs.append(h)
        h_prev = h
    h = jnp.concatenate(hs, axis=1)
    onehot = (jnp.arange(num_graphs)[:, None] == batch[None, :]).astype(jnp.float32)
    cnt = onehot.sum(axis=1, keepdims=True)
    hmax = jnp.stack([jnp.max(jnp.where((batch == g)[:, None], h, -jnp.inf), axis=0)
                      for g in range(num_graphs)])
    ppv = (onehot @ (h > 0).astype(jnp.float32)) / cnt
    return jnp.concatenate([hmax, ppv], axis=1)


# ------------------------------- Example ----------------------------------- #

if __name__ == "__main__":
    key = jax.random.PRNGKey(0)
    k_x, k_params = jax.random.split(key)

    # Two ring graphs of 8 nodes each (B=2, N=16), n_feat=8, hidden_dim=32.
    n_feat, hidden_dim = 8, 32
    nodes_per_graph, num_graphs = 8, 2
    n = nodes_per_graph * num_graphs

    edges = []
    for g in range(num_graphs):
        base = g * nodes_per_graph
        for i in range(nodes_per_graph):
            a = base + i
            b = base + (i + 1) % nodes_per_graph
            edges.append((a, b))
            edges.append((b, a))
    edge_index = jnp.asarray(edges, dtype=jnp.int32).T            # (2, E)
    batch = jnp.asarray(
        sum([[g] * nodes_per_graph for g in range(num_graphs)], []), dtype=jnp.int32)
    x = jax.random.normal(k_x, (n, n_feat), jnp.float32)

    params = init_params(k_params, n_feat, hidden_dim, theta=1.0)

    result = untrained_gcn_forward(params, x, edge_index, batch,
                                   num_graphs=num_graphs, out="ROCKET", act=None)
    result = jax.block_until_ready(result)

    assert result.shape == (num_graphs, 8 * hidden_dim), result.shape
    assert bool(jnp.all(jnp.isfinite(result)))

    # Sanity-check the MAX half against a pure-JAX f32 reference (bf16
    # tolerance).  The PPV half is a count-quantized sign test, so bf16
    # rounding near zero can legitimately shift entries by 1/|graph|; it is
    # covered by the shape/finiteness checks above.
    ref = _reference_forward(params, x, edge_index, batch, num_graphs, act=None)
    got_max = result[:, :4 * hidden_dim]
    ref_max = ref[:, :4 * hidden_dim]
    assert bool(jnp.allclose(got_max, ref_max, rtol=0.08, atol=0.08)), (
        float(jnp.max(jnp.abs(got_max - ref_max))))

    print("KERNEL_OK")
</pallas_src>

<mosaic_0001>
module attributes {stable_mosaic.version = 11 : i64} {
  func.func @_fused_gcn_rocket_kernel(%arg0: memref<128x128xbf16, #tpu.memory_space<vmem>>, %arg1: memref<1x128xf32, #tpu.memory_space<vmem>>, %arg2: memref<16x128xbf16, #tpu.memory_space<vmem>>, %arg3: memref<32x16xbf16, #tpu.memory_space<vmem>>, %arg4: memref<3x32x32xbf16, #tpu.memory_space<vmem>>, %arg5: memref<32x4xf32, #tpu.memory_space<vmem>>, %arg6: memref<8x128xbf16, #tpu.memory_space<vmem>>, %arg7: memref<8x1xf32, #tpu.memory_space<vmem>>, %arg8: memref<128x8xf32, #tpu.memory_space<vmem>>, %arg9: memref<8x128xf32, #tpu.memory_space<vmem>>, %arg10: memref<128x128xbf16, #tpu.memory_space<vmem>>) attributes {dimension_semantics = [], scalar_prefetch = 0 : i64, scratch_operands = 1 : i64, tpu.core_type = #tpu.core_type<tc>} {
    %c0 = arith.constant 0 : index
    %c0_0 = arith.constant 0 : index
    %0 = vector.load %arg0[%c0, %c0_0] : memref<128x128xbf16, #tpu.memory_space<vmem>>, vector<128x128xbf16>
    %c0_1 = arith.constant 0 : index
    %c0_2 = arith.constant 0 : index
    %1 = vector.load %arg1[%c0_1, %c0_2] : memref<1x128xf32, #tpu.memory_space<vmem>>, vector<1x128xf32>
    %c0_3 = arith.constant 0 : index
    %c0_4 = arith.constant 0 : index
    %2 = vector.load %arg2[%c0_3, %c0_4] : memref<16x128xbf16, #tpu.memory_space<vmem>>, vector<16x128xbf16>
    %c0_5 = arith.constant 0 : index
    %c0_6 = arith.constant 0 : index
    %3 = vector.load %arg3[%c0_5, %c0_6] : memref<32x16xbf16, #tpu.memory_space<vmem>>, vector<32x16xbf16>
    %cst = arith.constant dense<0.000000e+00> : vector<32x128xf32>
    %4 = tpu.matmul %3, %2, %cst {dimension_numbers = #tpu.dot_dimension_numbers<[1], [0], [0], [1], [0, 0, 1, 1], [], []>} : vector<32x16xbf16>, vector<16x128xbf16>, vector<32x128xf32> -> vector<32x128xf32>
    %5 = vector.broadcast %1 : vector<1x128xf32> to vector<32x128xf32>
    %6 = arith.mulf %4, %5 : vector<32x128xf32>
    %7 = arith.truncf %6 : vector<32x128xf32> to vector<32x128xbf16>
    %cst_7 = arith.constant dense<0.000000e+00> : vector<32x128xf32>
    %8 = tpu.matmul %7, %0, %cst_7 {dimension_numbers = #tpu.dot_dimension_numbers<[1], [0], [0], [1], [0, 0, 1, 1], [], []>} : vector<32x128xbf16>, vector<128x128xbf16>, vector<32x128xf32> -> vector<32x128xf32>
    %9 = vector.broadcast %1 : vector<1x128xf32> to vector<32x128xf32>
    %10 = arith.mulf %8, %9 : vector<32x128xf32>
    %c0_8 = arith.constant 0 : index
    %c0_9 = arith.constant 0 : index
    %11 = vector.load %arg5[%c0_8, %c0_9] : memref<32x4xf32, #tpu.memory_space<vmem>>, vector<32x1xf32>
    %12 = vector.broadcast %11 : vector<32x1xf32> to vector<32x128xf32>
    %13 = arith.addf %10, %12 : vector<32x128xf32>
    %14 = arith.truncf %13 : vector<32x128xf32> to vector<32x128xbf16>
    %c0_10 = arith.constant 0 : index
    %c0_11 = arith.constant 0 : index
    %15 = vector.load %arg10[%c0_10, %c0_11] : memref<128x128xbf16, #tpu.memory_space<vmem>>, vector<32x128xbf16>
    tpu.vector_store %arg10[%c0_10, %c0_11], %14 {strides = array<i32>} : memref<128x128xbf16, #tpu.memory_space<vmem>>, vector<32x128xbf16>,
    %c0_12 = arith.constant 0 : index
    %c0_13 = arith.constant 0 : index
    %c0_14 = arith.constant 0 : index
    %16 = vector.load %arg4[%c0_12, %c0_13, %c0_14] : memref<3x32x32xbf16, #tpu.memory_space<vmem>>, vector<1x32x32xbf16>
    %17 = vector.shape_cast %16 : vector<1x32x32xbf16> to vector<32x32xbf16>
    %cst_15 = arith.constant dense<0.000000e+00> : vector<32x128xf32>
    %18 = tpu.matmul %17, %14, %cst_15 {dimension_numbers = #tpu.dot_dimension_numbers<[1], [0], [0], [1], [0, 0, 1, 1], [], []>} : vector<32x32xbf16>, vector<32x128xbf16>, vector<32x128xf32> -> vector<32x128xf32>
    %19 = vector.broadcast %1 : vector<1x128xf32> to vector<32x128xf32>
    %20 = arith.mulf %18, %19 : vector<32x128xf32>
    %21 = arith.truncf %20 : vector<32x128xf32> to vector<32x128xbf16>
    %cst_16 = arith.constant dense<0.000000e+00> : vector<32x128xf32>
    %22 = tpu.matmul %21, %0, %cst_16 {dimension_numbers = #tpu.dot_dimension_numbers<[1], [0], [0], [1], [0, 0, 1, 1], [], []>} : vector<32x128xbf16>, vector<128x128xbf16>, vector<32x128xf32> -> vector<32x128xf32>
    %23 = vector.broadcast %1 : vector<1x128xf32> to vector<32x128xf32>
    %24 = arith.mulf %22, %23 : vector<32x128xf32>
    %c0_17 = arith.constant 0 : index
    %c1 = arith.constant 1 : index
    %25 = vector.load %arg5[%c0_17, %c1] : memref<32x4xf32, #tpu.memory_space<vmem>>, vector<32x1xf32>
    %26 = vector.broadcast %25 : vector<32x1xf32> to vector<32x128xf32>
    %27 = arith.addf %24, %26 : vector<32x128xf32>
    %28 = arith.truncf %27 : vector<32x128xf32> to vector<32x128xbf16>
    %c32 = arith.constant 32 : index
    %c0_18 = arith.constant 0 : index
    %29 = vector.load %arg10[%c32, %c0_18] : memref<128x128xbf16, #tpu.memory_space<vmem>>, vector<32x128xbf16>
    tpu.vector_store %arg10[%c32, %c0_18], %28 {strides = array<i32>} : memref<128x128xbf16, #tpu.memory_space<vmem>>, vector<32x128xbf16>,
    %c1_19 = arith.constant 1 : index
    %c0_20 = arith.constant 0 : index
    %c0_21 = arith.constant 0 : index
    %30 = vector.load %arg4[%c1_19, %c0_20, %c0_21] : memref<3x32x32xbf16, #tpu.memory_space<vmem>>, vector<1x32x32xbf16>
    %31 = vector.shape_cast %30 : vector<1x32x32xbf16> to vector<32x32xbf16>
    %cst_22 = arith.constant dense<0.000000e+00> : vector<32x128xf32>
    %32 = tpu.matmul %31, %28, %cst_22 {dimension_numbers = #tpu.dot_dimension_numbers<[1], [0], [0], [1], [0, 0, 1, 1], [], []>} : vector<32x32xbf16>, vector<32x128xbf16>, vector<32x128xf32> -> vector<32x128xf32>
    %33 = vector.broadcast %1 : vector<1x128xf32> to vector<32x128xf32>
    %34 = arith.mulf %32, %33 : vector<32x128xf32>
    %35 = arith.truncf %34 : vector<32x128xf32> to vector<32x128xbf16>
    %cst_23 = arith.constant dense<0.000000e+00> : vector<32x128xf32>
    %36 = tpu.matmul %35, %0, %cst_23 {dimension_numbers = #tpu.dot_dimension_numbers<[1], [0], [0], [1], [0, 0, 1, 1], [], []>} : vector<32x128xbf16>, vector<128x128xbf16>, vector<32x128xf32> -> vector<32x128xf32>
    %37 = vector.broadcast %1 : vector<1x128xf32> to vector<32x128xf32>
    %38 = arith.mulf %36, %37 : vector<32x128xf32>
    %c0_24 = arith.constant 0 : index
    %c2 = arith.constant 2 : index
    %39 = vector.load %arg5[%c0_24, %c2] : memref<32x4xf32, #tpu.memory_space<vmem>>, vector<32x1xf32>
    %40 = vector.broadcast %39 : vector<32x1xf32> to vector<32x128xf32>
    %41 = arith.addf %38, %40 : vector<32x128xf32>
    %42 = arith.truncf %41 : vector<32x128xf32> to vector<32x128xbf16>
    %c64 = arith.constant 64 : index
    %c0_25 = arith.constant 0 : index
    %43 = vector.load %arg10[%c64, %c0_25] : memref<128x128xbf16, #tpu.memory_space<vmem>>, vector<32x128xbf16>
    tpu.vector_store %arg10[%c64, %c0_25], %42 {strides = array<i32>} : memref<128x128xbf16, #tpu.memory_space<vmem>>, vector<32x128xbf16>,
    %c2_26 = arith.constant 2 : index
    %c0_27 = arith.constant 0 : index
    %c0_28 = arith.constant 0 : index
    %44 = vector.load %arg4[%c2_26, %c0_27, %c0_28] : memref<3x32x32xbf16, #tpu.memory_space<vmem>>, vector<1x32x32xbf16>
    %45 = vector.shape_cast %44 : vector<1x32x32xbf16> to vector<32x32xbf16>
    %cst_29 = arith.constant dense<0.000000e+00> : vector<32x128xf32>
    %46 = tpu.matmul %45, %42, %cst_29 {dimension_numbers = #tpu.dot_dimension_numbers<[1], [0], [0], [1], [0, 0, 1, 1], [], []>} : vector<32x32xbf16>, vector<32x128xbf16>, vector<32x128xf32> -> vector<32x128xf32>
    %47 = vector.broadcast %1 : vector<1x128xf32> to vector<32x128xf32>
    %48 = arith.mulf %46, %47 : vector<32x128xf32>
    %49 = arith.truncf %48 : vector<32x128xf32> to vector<32x128xbf16>
    %cst_30 = arith.constant dense<0.000000e+00> : vector<32x128xf32>
    %50 = tpu.matmul %49, %0, %cst_30 {dimension_numbers = #tpu.dot_dimension_numbers<[1], [0], [0], [1], [0, 0, 1, 1], [], []>} : vector<32x128xbf16>, vector<128x128xbf16>, vector<32x128xf32> -> vector<32x128xf32>
    %51 = vector.broadcast %1 : vector<1x128xf32> to vector<32x128xf32>
    %52 = arith.mulf %50, %51 : vector<32x128xf32>
    %c0_31 = arith.constant 0 : index
    %c3 = arith.constant 3 : index
    %53 = vector.load %arg5[%c0_31, %c3] : memref<32x4xf32, #tpu.memory_space<vmem>>, vector<32x1xf32>
    %54 = vector.broadcast %53 : vector<32x1xf32> to vector<32x128xf32>
    %55 = arith.addf %52, %54 : vector<32x128xf32>
    %56 = arith.truncf %55 : vector<32x128xf32> to vector<32x128xbf16>
    %c96 = arith.constant 96 : index
    %c0_32 = arith.constant 0 : index
    %57 = vector.load %arg10[%c96, %c0_32] : memref<128x128xbf16, #tpu.memory_space<vmem>>, vector<32x128xbf16>
    tpu.vector_store %arg10[%c96, %c0_32], %56 {strides = array<i32>} : memref<128x128xbf16, #tpu.memory_space<vmem>>, vector<32x128xbf16>,
    %c0_33 = arith.constant 0 : index
    %c0_34 = arith.constant 0 : index
    %58 = vector.load %arg10[%c0_33, %c0_34] : memref<128x128xbf16, #tpu.memory_space<vmem>>, vector<128x128xbf16>
    %c0_35 = arith.constant 0 : index
    %c0_36 = arith.constant 0 : index
    %59 = vector.load %arg6[%c0_35, %c0_36] : memref<8x128xbf16, #tpu.memory_space<vmem>>, vector<8x128xbf16>
    %cst_37 = arith.constant 0.000000e+00 : bf16
    %60 = vector.broadcast %cst_37 : bf16 to vector<128x128xbf16>
    %61 = arith.cmpf ogt, %58, %60 : vector<128x128xbf16>
    %62 = arith.extui %61 : vector<128x128xi1> to vector<128x128xi32>
    %63 = arith.sitofp %62 : vector<128x128xi32> to vector<128x128xf32>
    %64 = arith.truncf %63 : vector<128x128xf32> to vector<128x128xbf16>
    %cst_38 = arith.constant dense<0.000000e+00> : vector<8x128xf32>
    %65 = tpu.matmul %59, %64, %cst_38 {dimension_numbers = #tpu.dot_dimension_numbers<[1], [1], [0], [0], [0, 0, 1, 0], [], []>} : vector<8x128xbf16>, vector<128x128xbf16>, vector<8x128xf32> -> vector<8x128xf32>
    %c0_39 = arith.constant 0 : index
    %c0_40 = arith.constant 0 : index
    %66 = vector.load %arg7[%c0_39, %c0_40] : memref<8x1xf32, #tpu.memory_space<vmem>>, vector<8x1xf32>
    %67 = vector.broadcast %66 : vector<8x1xf32> to vector<8x128xf32>
    %68 = arith.mulf %65, %67 : vector<8x128xf32>
    %c0_41 = arith.constant 0 : index
    %c0_42 = arith.constant 0 : index
    %69 = vector.load %arg9[%c0_41, %c0_42] : memref<8x128xf32, #tpu.memory_space<vmem>>, vector<8x128xf32>
    tpu.vector_store %arg9[%c0_41, %c0_42], %68 {strides = array<i32>} : memref<8x128xf32, #tpu.memory_space<vmem>>, vector<8x128xf32>,
    %70 = vector.extract_strided_slice %59 {offsets = [0, 0], sizes = [1, 128], strides = [1, 1]} : vector<8x128xbf16> to vector<1x128xbf16>
    %71 = vector.shape_cast %70 : vector<1x128xbf16> to vector<128xbf16>
    %72 = vector.shape_cast %71 : vector<128xbf16> to vector<1x128xbf16>
    %cst_43 = arith.constant 0.000000e+00 : bf16
    %73 = vector.broadcast %cst_43 : bf16 to vector<1x128xbf16>
    %74 = arith.cmpf ogt, %72, %73 : vector<1x128xbf16>
    %cst_44 = arith.constant -3.389530e+38 : bf16
    %75 = vector.shape_cast %74 : vector<1x128xi1> to vector<1x128xi1>
    %76 = vector.broadcast %75 : vector<1x128xi1> to vector<128x128xi1>
    %77 = vector.broadcast %cst_44 : bf16 to vector<128x128xbf16>
    %78 = arith.select %76, %58, %77 : vector<128x128xi1>, vector<128x128xbf16>
    %cst_45 = arith.constant dense<0xFF80> : vector<128xbf16>
    %79 = vector.multi_reduction <maximumf>, %78, %cst_45 [1] : vector<128x128xbf16> to vector<128xbf16>
    %80 = vector.shape_cast %79 : vector<128xbf16> to vector<128x1xbf16>
    %81 = arith.extf %80 : vector<128x1xbf16> to vector<128x1xf32>
    %c0_46 = arith.constant 0 : index
    %c0_47 = arith.constant 0 : index
    %82 = vector.load %arg8[%c0_46, %c0_47] : memref<128x8xf32, #tpu.memory_space<vmem>>, vector<128x1xf32>
    tpu.vector_store %arg8[%c0_46, %c0_47], %81 {strides = array<i32>} : memref<128x8xf32, #tpu.memory_space<vmem>>, vector<128x1xf32>,
    %83 = vector.extract_strided_slice %59 {offsets = [1, 0], sizes = [1, 128], strides = [1, 1]} : vector<8x128xbf16> to vector<1x128xbf16>
    %84 = vector.shape_cast %83 : vector<1x128xbf16> to vector<128xbf16>
    %85 = vector.shape_cast %84 : vector<128xbf16> to vector<1x128xbf16>
    %cst_48 = arith.constant 0.000000e+00 : bf16
    %86 = vector.broadcast %cst_48 : bf16 to vector<1x128xbf16>
    %87 = arith.cmpf ogt, %85, %86 : vector<1x128xbf16>
    %cst_49 = arith.constant -3.389530e+38 : bf16
    %88 = vector.shape_cast %87 : vector<1x128xi1> to vector<1x128xi1>
    %89 = vector.broadcast %88 : vector<1x128xi1> to vector<128x128xi1>
    %90 = vector.broadcast %cst_49 : bf16 to vector<128x128xbf16>
    %91 = arith.select %89, %58, %90 : vector<128x128xi1>, vector<128x128xbf16>
    %cst_50 = arith.constant dense<0xFF80> : vector<128xbf16>
    %92 = vector.multi_reduction <maximumf>, %91, %cst_50 [1] : vector<128x128xbf16> to vector<128xbf16>
    %93 = vector.shape_cast %92 : vector<128xbf16> to vector<128x1xbf16>
    %94 = arith.extf %93 : vector<128x1xbf16> to vector<128x1xf32>
    %c0_51 = arith.constant 0 : index
    %c1_52 = arith.constant 1 : index
    %95 = vector.load %arg8[%c0_51, %c1_52] : memref<128x8xf32, #tpu.memory_space<vmem>>, vector<128x1xf32>
    tpu.vector_store %arg8[%c0_51, %c1_52], %94 {strides = array<i32>} : memref<128x8xf32, #tpu.memory_space<vmem>>, vector<128x1xf32>,
    %96 = vector.extract_strided_slice %59 {offsets = [2, 0], sizes = [1, 128], strides = [1, 1]} : vector<8x128xbf16> to vector<1x128xbf16>
    %97 = vector.shape_cast %96 : vector<1x128xbf16> to vector<128xbf16>
    %98 = vector.shape_cast %97 : vector<128xbf16> to vector<1x128xbf16>
    %cst_53 = arith.constant 0.000000e+00 : bf16
    %99 = vector.broadcast %cst_53 : bf16 to vector<1x128xbf16>
    %100 = arith.cmpf ogt, %98, %99 : vector<1x128xbf16>
    %cst_54 = arith.constant -3.389530e+38 : bf16
    %101 = vector.shape_cast %100 : vector<1x128xi1> to vector<1x128xi1>
    %102 = vector.broadcast %101 : vector<1x128xi1> to vector<128x128xi1>
    %103 = vector.broadcast %cst_54 : bf16 to vector<128x128xbf16>
    %104 = arith.select %102, %58, %103 : vector<128x128xi1>, vector<128x128xbf16>
    %cst_55 = arith.constant dense<0xFF80> : vector<128xbf16>
    %105 = vector.multi_reduction <maximumf>, %104, %cst_55 [1] : vector<128x128xbf16> to vector<128xbf16>
    %106 = vector.shape_cast %105 : vector<128xbf16> to vector<128x1xbf16>
    %107 = arith.extf %106 : vector<128x1xbf16> to vector<128x1xf32>
    %c0_56 = arith.constant 0 : index
    %c2_57 = arith.constant 2 : index
    %108 = vector.load %arg8[%c0_56, %c2_57] : memref<128x8xf32, #tpu.memory_space<vmem>>, vector<128x1xf32>
    tpu.vector_store %arg8[%c0_56, %c2_57], %107 {strides = array<i32>} : memref<128x8xf32, #tpu.memory_space<vmem>>, vector<128x1xf32>,
    %109 = vector.extract_strided_slice %59 {offsets = [3, 0], sizes = [1, 128], strides = [1, 1]} : vector<8x128xbf16> to vector<1x128xbf16>
    %110 = vector.shape_cast %109 : vector<1x128xbf16> to vector<128xbf16>
    %111 = vector.shape_cast %110 : vector<128xbf16> to vector<1x128xbf16>
    %cst_58 = arith.constant 0.000000e+00 : bf16
    %112 = vector.broadcast %cst_58 : bf16 to vector<1x128xbf16>
    %113 = arith.cmpf ogt, %111, %112 : vector<1x128xbf16>
    %cst_59 = arith.constant -3.389530e+38 : bf16
    %114 = vector.shape_cast %113 : vector<1x128xi1> to vector<1x128xi1>
    %115 = vector.broadcast %114 : vector<1x128xi1> to vector<128x128xi1>
    %116 = vector.broadcast %cst_59 : bf16 to vector<128x128xbf16>
    %117 = arith.select %115, %58, %116 : vector<128x128xi1>, vector<128x128xbf16>
    %cst_60 = arith.constant dense<0xFF80> : vector<128xbf16>
    %118 = vector.multi_reduction <maximumf>, %117, %cst_60 [1] : vector<128x128xbf16> to vector<128xbf16>
    %119 = vector.shape_cast %118 : vector<128xbf16> to vector<128x1xbf16>
    %120 = arith.extf %119 : vector<128x1xbf16> to vector<128x1xf32>
    %c0_61 = arith.constant 0 : index
    %c3_62 = arith.constant 3 : index
    %121 = vector.load %arg8[%c0_61, %c3_62] : memref<128x8xf32, #tpu.memory_space<vmem>>, vector<128x1xf32>
    tpu.vector_store %arg8[%c0_61, %c3_62], %120 {strides = array<i32>} : memref<128x8xf32, #tpu.memory_space<vmem>>, vector<128x1xf32>,
    %122 = vector.extract_strided_slice %59 {offsets = [4, 0], sizes = [1, 128], strides = [1, 1]} : vector<8x128xbf16> to vector<1x128xbf16>
    %123 = vector.shape_cast %122 : vector<1x128xbf16> to vector<128xbf16>
    %124 = vector.shape_cast %123 : vector<128xbf16> to vector<1x128xbf16>
    %cst_63 = arith.constant 0.000000e+00 : bf16
    %125 = vector.broadcast %cst_63 : bf16 to vector<1x128xbf16>
    %126 = arith.cmpf ogt, %124, %125 : vector<1x128xbf16>
    %cst_64 = arith.constant -3.389530e+38 : bf16
    %127 = vector.shape_cast %126 : vector<1x128xi1> to vector<1x128xi1>
    %128 = vector.broadcast %127 : vector<1x128xi1> to vector<128x128xi1>
    %129 = vector.broadcast %cst_64 : bf16 to vector<128x128xbf16>
    %130 = arith.select %128, %58, %129 : vector<128x128xi1>, vector<128x128xbf16>
    %cst_65 = arith.constant dense<0xFF80> : vector<128xbf16>
    %131 = vector.multi_reduction <maximumf>, %130, %cst_65 [1] : vector<128x128xbf16> to vector<128xbf16>
    %132 = vector.shape_cast %131 : vector<128xbf16> to vector<128x1xbf16>
    %133 = arith.extf %132 : vector<128x1xbf16> to vector<128x1xf32>
    %c0_66 = arith.constant 0 : index
    %c4 = arith.constant 4 : index
    %134 = vector.load %arg8[%c0_66, %c4] : memref<128x8xf32, #tpu.memory_space<vmem>>, vector<128x1xf32>
    tpu.vector_store %arg8[%c0_66, %c4], %133 {strides = array<i32>} : memref<128x8xf32, #tpu.memory_space<vmem>>, vector<128x1xf32>,
    %135 = vector.extract_strided_slice %59 {offsets = [5, 0], sizes = [1, 128], strides = [1, 1]} : vector<8x128xbf16> to vector<1x128xbf16>
    %136 = vector.shape_cast %135 : vector<1x128xbf16> to vector<128xbf16>
    %137 = vector.shape_cast %136 : vector<128xbf16> to vector<1x128xbf16>
    %cst_67 = arith.constant 0.000000e+00 : bf16
    %138 = vector.broadcast %cst_67 : bf16 to vector<1x128xbf16>
    %139 = arith.cmpf ogt, %137, %138 : vector<1x128xbf16>
    %cst_68 = arith.constant -3.389530e+38 : bf16
    %140 = vector.shape_cast %139 : vector<1x128xi1> to vector<1x128xi1>
    %141 = vector.broadcast %140 : vector<1x128xi1> to vector<128x128xi1>
    %142 = vector.broadcast %cst_68 : bf16 to vector<128x128xbf16>
    %143 = arith.select %141, %58, %142 : vector<128x128xi1>, vector<128x128xbf16>
    %cst_69 = arith.constant dense<0xFF80> : vector<128xbf16>
    %144 = vector.multi_reduction <maximumf>, %143, %cst_69 [1] : vector<128x128xbf16> to vector<128xbf16>
    %145 = vector.shape_cast %144 : vector<128xbf16> to vector<128x1xbf16>
    %146 = arith.extf %145 : vector<128x1xbf16> to vector<128x1xf32>
    %c0_70 = arith.constant 0 : index
    %c5 = arith.constant 5 : index
    %147 = vector.load %arg8[%c0_70, %c5] : memref<128x8xf32, #tpu.memory_space<vmem>>, vector<128x1xf32>
    tpu.vector_store %arg8[%c0_70, %c5], %146 {strides = array<i32>} : memref<128x8xf32, #tpu.memory_space<vmem>>, vector<128x1xf32>,
    %148 = vector.extract_strided_slice %59 {offsets = [6, 0], sizes = [1, 128], strides = [1, 1]} : vector<8x128xbf16> to vector<1x128xbf16>
    %149 = vector.shape_cast %148 : vector<1x128xbf16> to vector<128xbf16>
    %150 = vector.shape_cast %149 : vector<128xbf16> to vector<1x128xbf16>
    %cst_71 = arith.constant 0.000000e+00 : bf16
    %151 = vector.broadcast %cst_71 : bf16 to vector<1x128xbf16>
    %152 = arith.cmpf ogt, %150, %151 : vector<1x128xbf16>
    %cst_72 = arith.constant -3.389530e+38 : bf16
    %153 = vector.shape_cast %152 : vector<1x128xi1> to vector<1x128xi1>
    %154 = vector.broadcast %153 : vector<1x128xi1> to vector<128x128xi1>
    %155 = vector.broadcast %cst_72 : bf16 to vector<128x128xbf16>
    %156 = arith.select %154, %58, %155 : vector<128x128xi1>, vector<128x128xbf16>
    %cst_73 = arith.constant dense<0xFF80> : vector<128xbf16>
    %157 = vector.multi_reduction <maximumf>, %156, %cst_73 [1] : vector<128x128xbf16> to vector<128xbf16>
    %158 = vector.shape_cast %157 : vector<128xbf16> to vector<128x1xbf16>
    %159 = arith.extf %158 : vector<128x1xbf16> to vector<128x1xf32>
    %c0_74 = arith.constant 0 : index
    %c6 = arith.constant 6 : index
    %160 = vector.load %arg8[%c0_74, %c6] : memref<128x8xf32, #tpu.memory_space<vmem>>, vector<128x1xf32>
    tpu.vector_store %arg8[%c0_74, %c6], %159 {strides = array<i32>} : memref<128x8xf32, #tpu.memory_space<vmem>>, vector<128x1xf32>,
    %161 = vector.extract_strided_slice %59 {offsets = [7, 0], sizes = [1, 128], strides = [1, 1]} : vector<8x128xbf16> to vector<1x128xbf16>
    %162 = vector.shape_cast %161 : vector<1x128xbf16> to vector<128xbf16>
    %163 = vector.shape_cast %162 : vector<128xbf16> to vector<1x128xbf16>
    %cst_75 = arith.constant 0.000000e+00 : bf16
    %164 = vector.broadcast %cst_75 : bf16 to vector<1x128xbf16>
    %165 = arith.cmpf ogt, %163, %164 : vector<1x128xbf16>
    %cst_76 = arith.constant -3.389530e+38 : bf16
    %166 = vector.shape_cast %165 : vector<1x128xi1> to vector<1x128xi1>
    %167 = vector.broadcast %166 : vector<1x128xi1> to vector<128x128xi1>
    %168 = vector.broadcast %cst_76 : bf16 to vector<128x128xbf16>
    %169 = arith.select %167, %58, %168 : vector<128x128xi1>, vector<128x128xbf16>
    %cst_77 = arith.constant dense<0xFF80> : vector<128xbf16>
    %170 = vector.multi_reduction <maximumf>, %169, %cst_77 [1] : vector<128x128xbf16> to vector<128xbf16>
    %171 = vector.shape_cast %170 : vector<128xbf16> to vector<128x1xbf16>
    %172 = arith.extf %171 : vector<128x1xbf16> to vector<128x1xf32>
    %c0_78 = arith.constant 0 : index
    %c7 = arith.constant 7 : index
    %173 = vector.load %arg8[%c0_78, %c7] : memref<128x8xf32, #tpu.memory_space<vmem>>, vector<128x1xf32>
    tpu.vector_store %arg8[%c0_78, %c7], %172 {strides = array<i32>} : memref<128x8xf32, #tpu.memory_space<vmem>>, vector<128x1xf32>,
    return
  }
}

</mosaic_0001>

<llo_original>
// kernel: untrained_gcn_forward.1
$region0: #{untrained_gcn_forward.1}
  #allocation0 [shape = 'u32[]', space=smem, size = 0x4, offset = 0x4, fixed_abs, tag = 'smem constant byte address 0x4 - core index']
  #allocation1 [shape = 'u32[72,128]{1,0:T(1,128)}', space=vmem, size = 0x9000, scoped, tag = 'internal scratch']
  #allocation2 [shape = 'bf16[128,128]{1,0:T(8,128)(2,1)}', space=vmem, size = 0x8000, scoped, tag = 'scratch operand']
  %s0 = inlined_call_operand.vmem [shape: bf16[128,128], index: 0, kind: input, shape index: {}]
  %s1 = inlined_call_operand.vmem [shape: f32[1,128], index: 1, kind: input, shape index: {}]
  %s2 = inlined_call_operand.vmem [shape: bf16[16,128], index: 2, kind: input, shape index: {}]
  %s3 = inlined_call_operand.vmem [shape: bf16[32,16], index: 3, kind: input, shape index: {}]
  %s4 = inlined_call_operand.vmem [shape: bf16[3,32,32], index: 4, kind: input, shape index: {}]
  %s5 = inlined_call_operand.vmem [shape: f32[32,4], index: 5, kind: input, shape index: {}]
  %s6 = inlined_call_operand.vmem [shape: bf16[8,128], index: 6, kind: input, shape index: {}]
  %s7 = inlined_call_operand.vmem [shape: f32[8,1], index: 7, kind: input, shape index: {}]
  %s8 = inlined_call_operand.vmem [shape: f32[128,8], index: 8, kind: output, shape index: {0}]
  %s9 = inlined_call_operand.vmem [shape: f32[8,128], index: 9, kind: output, shape index: {1}]
  %10 = xla_tuple %s8, %s9
  %s11 = sld [smem:[#allocation0]]
  $region50: #{untrained_gcn_forward.1} parent=0
    _
  %s13 = ssub.s32 1, %s11
  %s14 = scalar_select 0, %s13, %s11
  // Predicated region
  $region2: #{untrained_gcn_forward.1} parent=0 // pred_check
    _
  $region3: #{untrained_gcn_forward.1} parent=0 // pred_check_branch
    %16 = sbr.rel (0) target = $region5
  $region4: #{untrained_gcn_forward.1} parent=0 // pred_region
    _
  $region5: #{untrained_gcn_forward.1} parent=0 // pred_fallthru
    _
  // Predicated region
  $region6: #{untrained_gcn_forward.1} parent=0 // pred_check
    _
  $region7: #{untrained_gcn_forward.1} parent=0 // pred_check_branch
    %18 = sbr.rel (0) target = $region9
  $region8: #{untrained_gcn_forward.1} parent=0 // pred_region
    _
  $region9: #{untrained_gcn_forward.1} parent=0 // pred_fallthru
    _
  // Predicated region
  $region10: #{untrained_gcn_forward.1} parent=0 // pred_check
    _
  $region11: #{untrained_gcn_forward.1} parent=0 // pred_check_branch
    %20 = sbr.rel (0) target = $region13
  $region12: #{untrained_gcn_forward.1} parent=0 // pred_region
    _
  $region13: #{untrained_gcn_forward.1} parent=0 // pred_fallthru
    _
  // Predicated region
  $region14: #{untrained_gcn_forward.1} parent=0 // pred_check
    _
  $region15: #{untrained_gcn_forward.1} parent=0 // pred_check_branch
    %22 = sbr.rel (0) target = $region17
  $region16: #{untrained_gcn_forward.1} parent=0 // pred_region
    _
  $region17: #{untrained_gcn_forward.1} parent=0 // pred_fallthru
    _
  // Predicated region
  $region18: #{untrained_gcn_forward.1} parent=0 // pred_check
    _
  $region19: #{untrained_gcn_forward.1} parent=0 // pred_check_branch
    %24 = sbr.rel (0) target = $region21
  $region20: #{untrained_gcn_forward.1} parent=0 // pred_region
    _
  $region21: #{untrained_gcn_forward.1} parent=0 // pred_fallthru
    _
  // Predicated region
  $region22: #{untrained_gcn_forward.1} parent=0 // pred_check
    _
  $region23: #{untrained_gcn_forward.1} parent=0 // pred_check_branch
    %26 = sbr.rel (0) target = $region25
  $region24: #{untrained_gcn_forward.1} parent=0 // pred_region
    _
  $region25: #{untrained_gcn_forward.1} parent=0 // pred_fallthru
    _
  // Predicated region
  $region26: #{untrained_gcn_forward.1} parent=0 // pred_check
    _
  $region27: #{untrained_gcn_forward.1} parent=0 // pred_check_branch
    %28 = sbr.rel (0) target = $region29
  $region28: #{untrained_gcn_forward.1} parent=0 // pred_region
    _
  $region29: #{untrained_gcn_forward.1} parent=0 // pred_fallthru
    _
  // Predicated region
  $region30: #{untrained_gcn_forward.1} parent=0 // pred_check
    _
  $region31: #{untrained_gcn_forward.1} parent=0 // pred_check_branch
    %30 = sbr.rel (0) target = $region33
  $region32: #{untrained_gcn_forward.1} parent=0 // pred_region
    _
  $region33: #{untrained_gcn_forward.1} parent=0 // pred_fallthru
    _
  %v33 = vld [vmem:[%s0] sm:$0xf]
  %v34 = vld [vmem:[%s0 + $0x4] sm:$0xf]
  %v35 = vld [vmem:[%s0 + $0x8] sm:$0xf]
  %v36 = vld [vmem:[%s0 + $0xc] sm:$0xf]
  %v37 = vld [vmem:[%s0 + $0x10] sm:$0xf]
  %v38 = vld [vmem:[%s0 + $0x14] sm:$0xf]
  %v39 = vld [vmem:[%s0 + $0x18] sm:$0xf]
  %v40 = vld [vmem:[%s0 + $0x1c] sm:$0xf]
  %v41 = vld [vmem:[%s0 + $0x20] sm:$0xf]
  %v42 = vld [vmem:[%s0 + $0x24] sm:$0xf]
  %v43 = vld [vmem:[%s0 + $0x28] sm:$0xf]
  %v44 = vld [vmem:[%s0 + $0x2c] sm:$0xf]
  %v45 = vld [vmem:[%s0 + $0x30] sm:$0xf]
  %v46 = vld [vmem:[%s0 + $0x34] sm:$0xf]
  %v47 = vld [vmem:[%s0 + $0x38] sm:$0xf]
  %v48 = vld [vmem:[%s0 + $0x3c] sm:$0xf]
  %v49 = vld [vmem:[%s1] sm:$0x1]
  %v50 = vld [vmem:[%s2] sm:$0xf]
  %v51 = vld [vmem:[%s2 + $0x4] sm:$0xf]
  %v52 = vld [vmem:[%s3] sm:$0xf]
  %v53 = vld [vmem:[%s3 + $0x4] sm:$0xf]
  %v54 = vld [vmem:[%s3 + $0x8] sm:$0xf]
  %v55 = vld [vmem:[%s3 + $0xc] sm:$0xf]
  %v60 = vunpack.c.l.b16 %v52
  %v61 = vunpack.c.l.b16 %v53
  %v62 = vunpack.c.l.b16 %v54
  %v63 = vunpack.c.l.b16 %v55
  %v64 = vpack.c.b16 %v61, %v60
  %v65 = vpack.c.b16 %v63, %v62
  %v68 = vunpack.c.l.b16 %v50
  %v69 = vunpack.c.l.b16 %v51
  %v70 = vpack.c.b16 %v69, %v68
  %vm72 = vcmask 130048
  %v74 = vsel %vm72, %v64, 0
  %v77 = vsel %vm72, %v65, 0
  %79 = vmatpush.bf16.msra.mxu0 0
  %80 = vmatpush.bf16.msra.mxu0 0
  %81 = vmatpush.bf16.msra.mxu0 0
  %82 = vmatpush.bf16.msra.mxu0 0
  %83 = vmatpush.bf16.msra.mxu0 0
  %84 = vmatpush.bf16.msra.mxu0 0
  %85 = vmatpush.bf16.msra.mxu0 0
  %86 = vmatpush.bf16.msra.mxu0 %v70
  %87 = vmatmul.bf16.gmra.mxu0 %v74
  %v88 = vpop.f32.mrf.mxu0
  %v89 = vadd.f32 0.0, %v88
  %v90 = vpop.f32.mrf.mxu0
  %v91 = vadd.f32 0.0, %v90
  %92 = vmatmul.bf16.gmra.mxu0 %v77
  %v93 = vpop.f32.mrf.mxu0
  %v94 = vadd.f32 0.0, %v93
  %v95 = vpop.f32.mrf.mxu0
  %v96 = vadd.f32 0.0, %v95
  %97 = vdwg.mxu0
  %v99 = vperm.slane %v49, 0
  %v101 = vmul.f32 %v89, %v99
  %v102 = vmul.f32 %v91, %v99
  %v103 = vmul.f32 %v94, %v99
  %v104 = vmul.f32 %v96, %v99
  %v105 = vpack.c.bf16 %v102, %v101
  %v106 = vpack.c.bf16 %v104, %v103
  %v123 = vunpack.c.l.b16 %v33
  %v124 = vunpack.c.l.b16 %v34
  %v125 = vunpack.c.l.b16 %v35
  %v126 = vunpack.c.l.b16 %v36
  %v127 = vunpack.c.l.b16 %v37
  %v128 = vunpack.c.l.b16 %v38
  %v129 = vunpack.c.l.b16 %v39
  %v130 = vunpack.c.l.b16 %v40
  %v131 = vunpack.c.l.b16 %v41
  %v132 = vunpack.c.l.b16 %v42
  %v133 = vunpack.c.l.b16 %v43
  %v134 = vunpack.c.l.b16 %v44
  %v135 = vunpack.c.l.b16 %v45
  %v136 = vunpack.c.l.b16 %v46
  %v137 = vunpack.c.l.b16 %v47
  %v138 = vunpack.c.l.b16 %v48
  %v139 = vpack.c.b16 %v124, %v123
  %v140 = vpack.c.b16 %v126, %v125
  %v141 = vpack.c.b16 %v128, %v127
  %v142 = vpack.c.b16 %v130, %v129
  %v143 = vpack.c.b16 %v132, %v131
  %v144 = vpack.c.b16 %v134, %v133
  %v145 = vpack.c.b16 %v136, %v135
  %v146 = vpack.c.b16 %v138, %v137
  %155 = vmatpush.bf16.msra.mxu0 %v146
  %156 = vmatpush.bf16.msra.mxu0 %v145
  %157 = vmatpush.bf16.msra.mxu0 %v144
  %158 = vmatpush.bf16.msra.mxu0 %v143
  %159 = vmatpush.bf16.msra.mxu0 %v142
  %160 = vmatpush.bf16.msra.mxu0 %v141
  %161 = vmatpush.bf16.msra.mxu0 %v140
  %162 = vmatpush.bf16.msra.mxu0 %v139
  %163 = vmatmul.bf16.gmra.mxu0 %v105
  %v164 = vpop.f32.mrf.mxu0
  %v165 = vadd.f32 0.0, %v164
  %v166 = vpop.f32.mrf.mxu0
  %v167 = vadd.f32 0.0, %v166
  %168 = vmatmul.bf16.gmra.mxu0 %v106
  %v169 = vpop.f32.mrf.mxu0
  %v170 = vadd.f32 0.0, %v169
  %v171 = vpop.f32.mrf.mxu0
  %v172 = vadd.f32 0.0, %v171
  %173 = vdwg.mxu0
  %v174 = vmul.f32 %v165, %v99
  %v175 = vmul.f32 %v167, %v99
  %v176 = vmul.f32 %v170, %v99
  %v177 = vmul.f32 %v172, %v99
  %v178 = vld [vmem:[%s5] sm:$0xff]
  %v179 = vld [vmem:[%s5 + $0x8] sm:$0xff]
  %v180 = vld [vmem:[%s5 + $0x10] sm:$0xff]
  %v181 = vld [vmem:[%s5 + $0x18] sm:$0xff]
  %183 = vset.pattern.permute.xlu0 0
  %184 = vperm.xlu0 %183, %v178
  %v185 = vpop.permute.xlu0 %184
  %188 = vset.pattern.permute.xlu0 0
  %189 = vperm.xlu0 %188, %v179
  %v190 = vpop.permute.xlu0 %189
  %193 = vset.pattern.permute.xlu0 0
  %194 = vperm.xlu0 %193, %v180
  %v195 = vpop.permute.xlu0 %194
  %198 = vset.pattern.permute.xlu0 0
  %199 = vperm.xlu0 %198, %v181
  %v200 = vpop.permute.xlu0 %199
  %v202 = vadd.f32 %v174, %v185
  %v203 = vadd.f32 %v175, %v190
  %v204 = vadd.f32 %v176, %v195
  %v205 = vadd.f32 %v177, %v200
  %v206 = vpack.c.bf16 %v202, %v202
  %v207 = vpack.c.bf16 %v203, %v203
  %v208 = vpack.c.bf16 %v204, %v204
  %v209 = vpack.c.bf16 %v205, %v205
  %210 = vst [vmem:[#allocation2] sm:$0xf] %v206
  %211 = vst [vmem:[#allocation2 + $0x4] sm:$0xf] %v207
  %212 = vst [vmem:[#allocation2 + $0x8] sm:$0xf] %v208
  %213 = vst [vmem:[#allocation2 + $0xc] sm:$0xf] %v209
  %v214 = vld [vmem:[%s4] sm:$0xf]
  %v215 = vld [vmem:[%s4 + $0x4] sm:$0xf]
  %v216 = vld [vmem:[%s4 + $0x8] sm:$0xf]
  %v217 = vld [vmem:[%s4 + $0xc] sm:$0xf]
  %v222 = vunpack.c.l.b16 %v214
  %v223 = vunpack.c.l.b16 %v215
  %v224 = vunpack.c.l.b16 %v216
  %v225 = vunpack.c.l.b16 %v217
  %v226 = vpack.c.b16 %v223, %v222
  %v227 = vpack.c.b16 %v225, %v224
  %v232 = vunpack.c.l.b16 %v206
  %v233 = vunpack.c.l.b16 %v207
  %v234 = vunpack.c.l.b16 %v208
  %v235 = vunpack.c.l.b16 %v209
  %v236 = vpack.c.b16 %v233, %v232
  %v237 = vpack.c.b16 %v235, %v234
  %vm240 = vcmask 261120
  %v242 = vsel %vm240, %v226, 0
  %v245 = vsel %vm240, %v227, 0
  %247 = vmatpush.bf16.msra.mxu0 0
  %248 = vmatpush.bf16.msra.mxu0 0
  %249 = vmatpush.bf16.msra.mxu0 0
  %250 = vmatpush.bf16.msra.mxu0 0
  %251 = vmatpush.bf16.msra.mxu0 0
  %252 = vmatpush.bf16.msra.mxu0 0
  %253 = vmatpush.bf16.msra.mxu0 %v237
  %254 = vmatpush.bf16.msra.mxu0 %v236
  %255 = vmatmul.bf16.gmra.mxu0 %v242
  %v256 = vpop.f32.mrf.mxu0
  %v257 = vadd.f32 0.0, %v256
  %v258 = vpop.f32.mrf.mxu0
  %v259 = vadd.f32 0.0, %v258
  %260 = vmatmul.bf16.gmra.mxu0 %v245
  %v261 = vpop.f32.mrf.mxu0
  %v262 = vadd.f32 0.0, %v261
  %v263 = vpop.f32.mrf.mxu0
  %v264 = vadd.f32 0.0, %v263
  %265 = vdwg.mxu0
  %v266 = vmul.f32 %v257, %v99
  %v267 = vmul.f32 %v259, %v99
  %v268 = vmul.f32 %v262, %v99
  %v269 = vmul.f32 %v264, %v99
  %v270 = vpack.c.bf16 %v267, %v266
  %v271 = vpack.c.bf16 %v269, %v268
  %272 = vmatpush.bf16.msra.mxu0 %v146
  %273 = vmatpush.bf16.msra.mxu0 %v145
  %274 = vmatpush.bf16.msra.mxu0 %v144
  %275 = vmatpush.bf16.msra.mxu0 %v143
  %276 = vmatpush.bf16.msra.mxu0 %v142
  %277 = vmatpush.bf16.msra.mxu0 %v141
  %278 = vmatpush.bf16.msra.mxu0 %v140
  %279 = vmatpush.bf16.msra.mxu0 %v139
  %280 = vmatmul.bf16.gmra.mxu0 %v270
  %v281 = vpop.f32.mrf.mxu0
  %v282 = vadd.f32 0.0, %v281
  %v283 = vpop.f32.mrf.mxu0
  %v284 = vadd.f32 0.0, %v283
  %285 = vmatmul.bf16.gmra.mxu0 %v271
  %v286 = vpop.f32.mrf.mxu0
  %v287 = vadd.f32 0.0, %v286
  %v288 = vpop.f32.mrf.mxu0
  %v289 = vadd.f32 0.0, %v288
  %290 = vdwg.mxu0
  %v291 = vmul.f32 %v282, %v99
  %v292 = vmul.f32 %v284, %v99
  %v293 = vmul.f32 %v287, %v99
  %v294 = vmul.f32 %v289, %v99
  %v295 = vld [vmem:[%s5] sm:$0xff]
  %v296 = vld [vmem:[%s5 + $0x8] sm:$0xff]
  %v297 = vld [vmem:[%s5 + $0x10] sm:$0xff]
  %v298 = vld [vmem:[%s5 + $0x18] sm:$0xff]
  %300 = vset.pattern.permute.xlu0 1
  %301 = vperm.xlu0 %300, %v295
  %v302 = vpop.permute.xlu0 %301
  %305 = vset.pattern.permute.xlu0 1
  %306 = vperm.xlu0 %305, %v296
  %v307 = vpop.permute.xlu0 %306
  %310 = vset.pattern.permute.xlu0 1
  %311 = vperm.xlu0 %310, %v297
  %v312 = vpop.permute.xlu0 %311
  %315 = vset.pattern.permute.xlu0 1
  %316 = vperm.xlu0 %315, %v298
  %v317 = vpop.permute.xlu0 %316
  %v319 = vadd.f32 %v291, %v302
  %v320 = vadd.f32 %v292, %v307
  %v321 = vadd.f32 %v293, %v312
  %v322 = vadd.f32 %v294, %v317
  %v323 = vpack.c.bf16 %v319, %v319
  %v324 = vpack.c.bf16 %v320, %v320
  %v325 = vpack.c.bf16 %v321, %v321
  %v326 = vpack.c.bf16 %v322, %v322
  %327 = vst [vmem:[#allocation2 + $0x10] sm:$0xf] %v323
  %328 = vst [vmem:[#allocation2 + $0x14] sm:$0xf] %v324
  %329 = vst [vmem:[#allocation2 + $0x18] sm:$0xf] %v325
  %330 = vst [vmem:[#allocation2 + $0x1c] sm:$0xf] %v326
  %s331 = scalar_lea.vmem %s4, 16
  %v332 = vld [vmem:[%s331] sm:$0xf]
  %v333 = vld [vmem:[%s331 + $0x4] sm:$0xf]
  %v334 = vld [vmem:[%s331 + $0x8] sm:$0xf]
  %v335 = vld [vmem:[%s331 + $0xc] sm:$0xf]
  %v340 = vunpack.c.l.b16 %v332
  %v341 = vunpack.c.l.b16 %v333
  %v342 = vunpack.c.l.b16 %v334
  %v343 = vunpack.c.l.b16 %v335
  %v344 = vpack.c.b16 %v341, %v340
  %v345 = vpack.c.b16 %v343, %v342
  %v350 = vunpack.c.l.b16 %v323
  %v351 = vunpack.c.l.b16 %v324
  %v352 = vunpack.c.l.b16 %v325
  %v353 = vunpack.c.l.b16 %v326
  %v354 = vpack.c.b16 %v351, %v350
  %v355 = vpack.c.b16 %v353, %v352
  %v359 = vsel %vm240, %v344, 0
  %v362 = vsel %vm240, %v345, 0
  %364 = vmatpush.bf16.msra.mxu0 0
  %365 = vmatpush.bf16.msra.mxu0 0
  %366 = vmatpush.bf16.msra.mxu0 0
  %367 = vmatpush.bf16.msra.mxu0 0
  %368 = vmatpush.bf16.msra.mxu0 0
  %369 = vmatpush.bf16.msra.mxu0 0
  %370 = vmatpush.bf16.msra.mxu0 %v355
  %371 = vmatpush.bf16.msra.mxu0 %v354
  %372 = vmatmul.bf16.gmra.mxu0 %v359
  %v373 = vpop.f32.mrf.mxu0
  %v374 = vadd.f32 0.0, %v373
  %v375 = vpop.f32.mrf.mxu0
  %v376 = vadd.f32 0.0, %v375
  %377 = vmatmul.bf16.gmra.mxu0 %v362
  %v378 = vpop.f32.mrf.mxu0
  %v379 = vadd.f32 0.0, %v378
  %v380 = vpop.f32.mrf.mxu0
  %v381 = vadd.f32 0.0, %v380
  %382 = vdwg.mxu0
  %v383 = vmul.f32 %v374, %v99
  %v384 = vmul.f32 %v376, %v99
  %v385 = vmul.f32 %v379, %v99
  %v386 = vmul.f32 %v381, %v99
  %v387 = vpack.c.bf16 %v384, %v383
  %v388 = vpack.c.bf16 %v386, %v385
  %389 = vmatpush.bf16.msra.mxu0 %v146
  %390 = vmatpush.bf16.msra.mxu0 %v145
  %391 = vmatpush.bf16.msra.mxu0 %v144
  %392 = vmatpush.bf16.msra.mxu0 %v143
  %393 = vmatpush.bf16.msra.mxu0 %v142
  %394 = vmatpush.bf16.msra.mxu0 %v141
  %395 = vmatpush.bf16.msra.mxu0 %v140
  %396 = vmatpush.bf16.msra.mxu0 %v139
  %397 = vmatmul.bf16.gmra.mxu0 %v387
  %v398 = vpop.f32.mrf.mxu0
  %v399 = vadd.f32 0.0, %v398
  %v400 = vpop.f32.mrf.mxu0
  %v401 = vadd.f32 0.0, %v400
  %402 = vmatmul.bf16.gmra.mxu0 %v388
  %v403 = vpop.f32.mrf.mxu0
  %v404 = vadd.f32 0.0, %v403
  %v405 = vpop.f32.mrf.mxu0
  %v406 = vadd.f32 0.0, %v405
  %407 = vdwg.mxu0
  %v408 = vmul.f32 %v399, %v99
  %v409 = vmul.f32 %v401, %v99
  %v410 = vmul.f32 %v404, %v99
  %v411 = vmul.f32 %v406, %v99
  %v412 = vld [vmem:[%s5] sm:$0xff]
  %v413 = vld [vmem:[%s5 + $0x8] sm:$0xff]
  %v414 = vld [vmem:[%s5 + $0x10] sm:$0xff]
  %v415 = vld [vmem:[%s5 + $0x18] sm:$0xff]
  %417 = vset.pattern.permute.xlu0 2
  %418 = vperm.xlu0 %417, %v412
  %v419 = vpop.permute.xlu0 %418
  %422 = vset.pattern.permute.xlu0 2
  %423 = vperm.xlu0 %422, %v413
  %v424 = vpop.permute.xlu0 %423
  %427 = vset.pattern.permute.xlu0 2
  %428 = vperm.xlu0 %427, %v414
  %v429 = vpop.permute.xlu0 %428
  %432 = vset.pattern.permute.xlu0 2
  %433 = vperm.xlu0 %432, %v415
  %v434 = vpop.permute.xlu0 %433
  %v436 = vadd.f32 %v408, %v419
  %v437 = vadd.f32 %v409, %v424
  %v438 = vadd.f32 %v410, %v429
  %v439 = vadd.f32 %v411, %v434
  %v440 = vpack.c.bf16 %v436, %v436
  %v441 = vpack.c.bf16 %v437, %v437
  %v442 = vpack.c.bf16 %v438, %v438
  %v443 = vpack.c.bf16 %v439, %v439
  %444 = vst [vmem:[#allocation2 + $0x20] sm:$0xf] %v440
  %445 = vst [vmem:[#allocation2 + $0x24] sm:$0xf] %v441
  %446 = vst [vmem:[#allocation2 + $0x28] sm:$0xf] %v442
  %447 = vst [vmem:[#allocation2 + $0x2c] sm:$0xf] %v443
  %s448 = scalar_lea.vmem %s4, 32
  %v449 = vld [vmem:[%s448] sm:$0xf]
  %v450 = vld [vmem:[%s448 + $0x4] sm:$0xf]
  %v451 = vld [vmem:[%s448 + $0x8] sm:$0xf]
  %v452 = vld [vmem:[%s448 + $0xc] sm:$0xf]
  %v457 = vunpack.c.l.b16 %v449
  %v458 = vunpack.c.l.b16 %v450
  %v459 = vunpack.c.l.b16 %v451
  %v460 = vunpack.c.l.b16 %v452
  %v461 = vpack.c.b16 %v458, %v457
  %v462 = vpack.c.b16 %v460, %v459
  %v467 = vunpack.c.l.b16 %v440
  %v468 = vunpack.c.l.b16 %v441
  %v469 = vunpack.c.l.b16 %v442
  %v470 = vunpack.c.l.b16 %v443
  %v471 = vpack.c.b16 %v468, %v467
  %v472 = vpack.c.b16 %v470, %v469
  %v476 = vsel %vm240, %v461, 0
  %v479 = vsel %vm240, %v462, 0
  %481 = vmatpush.bf16.msra.mxu0 0
  %482 = vmatpush.bf16.msra.mxu0 0
  %483 = vmatpush.bf16.msra.mxu0 0
  %484 = vmatpush.bf16.msra.mxu0 0
  %485 = vmatpush.bf16.msra.mxu0 0
  %486 = vmatpush.bf16.msra.mxu0 0
  %487 = vmatpush.bf16.msra.mxu0 %v472
  %488 = vmatpush.bf16.msra.mxu0 %v471
  %489 = vmatmul.bf16.gmra.mxu0 %v476
  %v490 = vpop.f32.mrf.mxu0
  %v491 = vadd.f32 0.0, %v490
  %v492 = vpop.f32.mrf.mxu0
  %v493 = vadd.f32 0.0, %v492
  %494 = vmatmul.bf16.gmra.mxu0 %v479
  %v495 = vpop.f32.mrf.mxu0
  %v496 = vadd.f32 0.0, %v495
  %v497 = vpop.f32.mrf.mxu0
  %v498 = vadd.f32 0.0, %v497
  %499 = vdwg.mxu0
  %v500 = vmul.f32 %v491, %v99
  %v501 = vmul.f32 %v493, %v99
  %v502 = vmul.f32 %v496, %v99
  %v503 = vmul.f32 %v498, %v99
  %v504 = vpack.c.bf16 %v501, %v500
  %v505 = vpack.c.bf16 %v503, %v502
  %506 = vmatpush.bf16.msra.mxu0 %v146
  %507 = vmatpush.bf16.msra.mxu0 %v145
  %508 = vmatpush.bf16.msra.mxu0 %v144
  %509 = vmatpush.bf16.msra.mxu0 %v143
  %510 = vmatpush.bf16.msra.mxu0 %v142
  %511 = vmatpush.bf16.msra.mxu0 %v141
  %512 = vmatpush.bf16.msra.mxu0 %v140
  %513 = vmatpush.bf16.msra.mxu0 %v139
  %514 = vmatmul.bf16.gmra.mxu0 %v504
  %v515 = vpop.f32.mrf.mxu0
  %v516 = vadd.f32 0.0, %v515
  %v517 = vpop.f32.mrf.mxu0
  %v518 = vadd.f32 0.0, %v517
  %519 = vmatmul.bf16.gmra.mxu0 %v505
  %v520 = vpop.f32.mrf.mxu0
  %v521 = vadd.f32 0.0, %v520
  %v522 = vpop.f32.mrf.mxu0
  %v523 = vadd.f32 0.0, %v522
  %524 = vdwg.mxu0
  %v525 = vmul.f32 %v516, %v99
  %v526 = vmul.f32 %v518, %v99
  %v527 = vmul.f32 %v521, %v99
  %v528 = vmul.f32 %v523, %v99
  %v529 = vld [vmem:[%s5] sm:$0xff]
  %v530 = vld [vmem:[%s5 + $0x8] sm:$0xff]
  %v531 = vld [vmem:[%s5 + $0x10] sm:$0xff]
  %v532 = vld [vmem:[%s5 + $0x18] sm:$0xff]
  %534 = vset.pattern.permute.xlu0 3
  %535 = vperm.xlu0 %534, %v529
  %v536 = vpop.permute.xlu0 %535
  %539 = vset.pattern.permute.xlu0 3
  %540 = vperm.xlu0 %539, %v530
  %v541 = vpop.permute.xlu0 %540
  %544 = vset.pattern.permute.xlu0 3
  %545 = vperm.xlu0 %544, %v531
  %v546 = vpop.permute.xlu0 %545
  %549 = vset.pattern.permute.xlu0 3
  %550 = vperm.xlu0 %549, %v532
  %v551 = vpop.permute.xlu0 %550
  %v553 = vadd.f32 %v525, %v536
  %v554 = vadd.f32 %v526, %v541
  %v555 = vadd.f32 %v527, %v546
  %v556 = vadd.f32 %v528, %v551
  %v557 = vpack.c.bf16 %v553, %v553
  %v558 = vpack.c.bf16 %v554, %v554
  %v559 = vpack.c.bf16 %v555, %v555
  %v560 = vpack.c.bf16 %v556, %v556
  %561 = vst [vmem:[#allocation2 + $0x30] sm:$0xf] %v557
  %562 = vst [vmem:[#allocation2 + $0x34] sm:$0xf] %v558
  %563 = vst [vmem:[#allocation2 + $0x38] sm:$0xf] %v559
  %564 = vst [vmem:[#allocation2 + $0x3c] sm:$0xf] %v560
  %v565 = vld [vmem:[#allocation2] sm:$0xf]
  %v566 = vld [vmem:[#allocation2 + $0x4] sm:$0xf]
  %v567 = vld [vmem:[#allocation2 + $0x8] sm:$0xf]
  %v568 = vld [vmem:[#allocation2 + $0xc] sm:$0xf]
  %v569 = vld [vmem:[#allocation2 + $0x10] sm:$0xf]
  %v570 = vld [vmem:[#allocation2 + $0x14] sm:$0xf]
  %v571 = vld [vmem:[#allocation2 + $0x18] sm:$0xf]
  %v572 = vld [vmem:[#allocation2 + $0x1c] sm:$0xf]
  %v573 = vld [vmem:[#allocation2 + $0x20] sm:$0xf]
  %v574 = vld [vmem:[#allocation2 + $0x24] sm:$0xf]
  %v575 = vld [vmem:[#allocation2 + $0x28] sm:$0xf]
  %v576 = vld [vmem:[#allocation2 + $0x2c] sm:$0xf]
  %v577 = vld [vmem:[#allocation2 + $0x30] sm:$0xf]
  %v578 = vld [vmem:[#allocation2 + $0x34] sm:$0xf]
  %v579 = vld [vmem:[#allocation2 + $0x38] sm:$0xf]
  %v580 = vld [vmem:[#allocation2 + $0x3c] sm:$0xf]
  %v581 = vld [vmem:[%s6] sm:$0xf]
  %v582 = vunpack.c.l.bf16 %v565
  %v583 = vunpack.c.l.bf16 %v566
  %v584 = vunpack.c.l.bf16 %v567
  %v585 = vunpack.c.l.bf16 %v568
  %v586 = vunpack.c.l.bf16 %v569
  %v587 = vunpack.c.l.bf16 %v570
  %v588 = vunpack.c.l.bf16 %v571
  %v589 = vunpack.c.l.bf16 %v572
  %v590 = vunpack.c.l.bf16 %v573
  %v591 = vunpack.c.l.bf16 %v574
  %v592 = vunpack.c.l.bf16 %v575
  %v593 = vunpack.c.l.bf16 %v576
  %v594 = vunpack.c.l.bf16 %v577
  %v595 = vunpack.c.l.bf16 %v578
  %v596 = vunpack.c.l.bf16 %v579
  %v597 = vunpack.c.l.bf16 %v580
  %vm598 = vcmp.gt.f32.partialorder %v582, 0.0
  %vm599 = vcmp.gt.f32.partialorder %v583, 0.0
  %vm600 = vcmp.gt.f32.partialorder %v584, 0.0
  %vm601 = vcmp.gt.f32.partialorder %v585, 0.0
  %vm602 = vcmp.gt.f32.partialorder %v586, 0.0
  %vm603 = vcmp.gt.f32.partialorder %v587, 0.0
  %vm604 = vcmp.gt.f32.partialorder %v588, 0.0
  %vm605 = vcmp.gt.f32.partialorder %v589, 0.0
  %vm606 = vcmp.gt.f32.partialorder %v590, 0.0
  %vm607 = vcmp.gt.f32.partialorder %v591, 0.0
  %vm608 = vcmp.gt.f32.partialorder %v592, 0.0
  %vm609 = vcmp.gt.f32.partialorder %v593, 0.0
  %vm610 = vcmp.gt.f32.partialorder %v594, 0.0
  %vm611 = vcmp.gt.f32.partialorder %v595, 0.0
  %vm612 = vcmp.gt.f32.partialorder %v596, 0.0
  %vm613 = vcmp.gt.f32.partialorder %v597, 0.0
  %v614 = vsel %vm598, 1, 0
  %v615 = vsel %vm599, 1, 0
  %v616 = vsel %vm600, 1, 0
  %v617 = vsel %vm601, 1, 0
  %v618 = vsel %vm602, 1, 0
  %v619 = vsel %vm603, 1, 0
  %v620 = vsel %vm604, 1, 0
  %v621 = vsel %vm605, 1, 0
  %v622 = vsel %vm606, 1, 0
  %v623 = vsel %vm607, 1, 0
  %v624 = vsel %vm608, 1, 0
  %v625 = vsel %vm609, 1, 0
  %v626 = vsel %vm610, 1, 0
  %v627 = vsel %vm611, 1, 0
  %v628 = vsel %vm612, 1, 0
  %v629 = vsel %vm613, 1, 0
  %v630 = vcvt.s32.f32 %v614
  %v631 = vcvt.s32.f32 %v615
  %v632 = vcvt.s32.f32 %v616
  %v633 = vcvt.s32.f32 %v617
  %v634 = vcvt.s32.f32 %v618
  %v635 = vcvt.s32.f32 %v619
  %v636 = vcvt.s32.f32 %v620
  %v637 = vcvt.s32.f32 %v621
  %v638 = vcvt.s32.f32 %v622
  %v639 = vcvt.s32.f32 %v623
  %v640 = vcvt.s32.f32 %v624
  %v641 = vcvt.s32.f32 %v625
  %v642 = vcvt.s32.f32 %v626
  %v643 = vcvt.s32.f32 %v627
  %v644 = vcvt.s32.f32 %v628
  %v645 = vcvt.s32.f32 %v629
  %v646 = vpack.c.bf16 %v631, %v630
  %v647 = vpack.c.bf16 %v633, %v632
  %v648 = vpack.c.bf16 %v635, %v634
  %v649 = vpack.c.bf16 %v637, %v636
  %v650 = vpack.c.bf16 %v639, %v638
  %v651 = vpack.c.bf16 %v641, %v640
  %v652 = vpack.c.bf16 %v643, %v642
  %v653 = vpack.c.bf16 %v645, %v644
  %654 = vmatpush.bf16.xpose.msra.mxu0 %v653
  %655 = vmatpush.bf16.xpose.msra.mxu0 %v652
  %656 = vmatpush.bf16.xpose.msra.mxu0 %v651
  %657 = vmatpush.bf16.xpose.msra.mxu0 %v650
  %658 = vmatpush.bf16.xpose.msra.mxu0 %v649
  %659 = vmatpush.bf16.xpose.msra.mxu0 %v648
  %660 = vmatpush.bf16.xpose.msra.mxu0 %v647
  %661 = vmatpush.bf16.xpose.msra.mxu0 %v646
  %662 = vmatmul.bf16.gmra.mxu0 %v581
  %v663 = vpop.f32.mrf.mxu0
  %v664 = vadd.f32 0.0, %v663
  %v665 = vpop.f32.mrf.mxu0
  %666 = vdwg.mxu0
  %v667 = vld [vmem:[%s7] sm:$0xff]
  %669 = vset.pattern.permute.xlu0 0
  %670 = vperm.xlu0 %669, %v667
  %v671 = vpop.permute.xlu0 %670
  %v673 = vmul.f32 %v664, %v671
  %674 = vst [vmem:[%s9] sm:$0xff] %v673
  %v675 = vunpack.c.l.bf16 %v581
  %vm676 = vcmp.gt.f32.partialorder %v675, 0.0
  %v677 = vsel %vm676, 1, 0
  %v678 = vperm.slane %v677, 0
  %vm679 = vcmp.eq.s32.totalorder %v678, 1
  %vm680 = vmpackc.low %vm679, %vm679
  %v681 = vsel %vm680, %v565, 4286578559
  %v682 = vsel %vm680, %v566, 4286578559
  %v683 = vsel %vm680, %v567, 4286578559
  %v684 = vsel %vm680, %v568, 4286578559
  %v685 = vsel %vm680, %v569, 4286578559
  %v686 = vsel %vm680, %v570, 4286578559
  %v687 = vsel %vm680, %v571, 4286578559
  %v688 = vsel %vm680, %v572, 4286578559
  %v689 = vsel %vm680, %v573, 4286578559
  %v690 = vsel %vm680, %v574, 4286578559
  %v691 = vsel %vm680, %v575, 4286578559
  %v692 = vsel %vm680, %v576, 4286578559
  %v693 = vsel %vm680, %v577, 4286578559
  %v694 = vsel %vm680, %v578, 4286578559
  %v695 = vsel %vm680, %v579, 4286578559
  %v696 = vsel %vm680, %v580, 4286578559
  %v697 = vunpack.c.l.bf16 %v681
  %v698 = vunpack.c.l.bf16 %v682
  %v699 = vunpack.c.l.bf16 %v683
  %v700 = vunpack.c.l.bf16 %v684
  %v701 = vunpack.c.l.bf16 %v685
  %v702 = vunpack.c.l.bf16 %v686
  %v703 = vunpack.c.l.bf16 %v687
  %v704 = vunpack.c.l.bf16 %v688
  %v705 = vunpack.c.l.bf16 %v689
  %v706 = vunpack.c.l.bf16 %v690
  %v707 = vunpack.c.l.bf16 %v691
  %v708 = vunpack.c.l.bf16 %v692
  %v709 = vunpack.c.l.bf16 %v693
  %v710 = vunpack.c.l.bf16 %v694
  %v711 = vunpack.c.l.bf16 %v695
  %v712 = vunpack.c.l.bf16 %v696
  %713 = vmax.xlane.f32.xlu0 %v697
  %v714 = vpop.xlane.xlu0 %713
  %715 = vmax.xlane.f32.xlu0 %v698
  %v716 = vpop.xlane.xlu0 %715
  %717 = vmax.xlane.f32.xlu0 %v699
  %v718 = vpop.xlane.xlu0 %717
  %719 = vmax.xlane.f32.xlu0 %v700
  %v720 = vpop.xlane.xlu0 %719
  %721 = vmax.xlane.f32.xlu0 %v701
  %v722 = vpop.xlane.xlu0 %721
  %723 = vmax.xlane.f32.xlu0 %v702
  %v724 = vpop.xlane.xlu0 %723
  %725 = vmax.xlane.f32.xlu0 %v703
  %v726 = vpop.xlane.xlu0 %725
  %727 = vmax.xlane.f32.xlu0 %v704
  %v728 = vpop.xlane.xlu0 %727
  %729 = vmax.xlane.f32.xlu0 %v705
  %v730 = vpop.xlane.xlu0 %729
  %731 = vmax.xlane.f32.xlu0 %v706
  %v732 = vpop.xlane.xlu0 %731
  %733 = vmax.xlane.f32.xlu0 %v707
  %v734 = vpop.xlane.xlu0 %733
  %735 = vmax.xlane.f32.xlu0 %v708
  %v736 = vpop.xlane.xlu0 %735
  %737 = vmax.xlane.f32.xlu0 %v709
  %v738 = vpop.xlane.xlu0 %737
  %739 = vmax.xlane.f32.xlu0 %v710
  %v740 = vpop.xlane.xlu0 %739
  %741 = vmax.xlane.f32.xlu0 %v711
  %v742 = vpop.xlane.xlu0 %741
  %743 = vmax.xlane.f32.xlu0 %v712
  %v744 = vpop.xlane.xlu0 %743
  %v745 = vpack.c.bf16 %v714, %v714
  %v746 = vpack.c.bf16 %v716, %v716
  %v747 = vpack.c.bf16 %v718, %v718
  %v748 = vpack.c.bf16 %v720, %v720
  %v749 = vpack.c.bf16 %v722, %v722
  %v750 = vpack.c.bf16 %v724, %v724
  %v751 = vpack.c.bf16 %v726, %v726
  %v752 = vpack.c.bf16 %v728, %v728
  %v753 = vpack.c.bf16 %v730, %v730
  %v754 = vpack.c.bf16 %v732, %v732
  %v755 = vpack.c.bf16 %v734, %v734
  %v756 = vpack.c.bf16 %v736, %v736
  %v757 = vpack.c.bf16 %v738, %v738
  %v758 = vpack.c.bf16 %v740, %v740
  %v759 = vpack.c.bf16 %v742, %v742
  %v760 = vpack.c.bf16 %v744, %v744
  %v761 = vunpack.c.l.bf16 %v745
  %v762 = vunpack.c.l.bf16 %v746
  %v763 = vunpack.c.l.bf16 %v747
  %v764 = vunpack.c.l.bf16 %v748
  %v765 = vunpack.c.l.bf16 %v749
  %v766 = vunpack.c.l.bf16 %v750
  %v767 = vunpack.c.l.bf16 %v751
  %v768 = vunpack.c.l.bf16 %v752
  %v769 = vunpack.c.l.bf16 %v753
  %v770 = vunpack.c.l.bf16 %v754
  %v771 = vunpack.c.l.bf16 %v755
  %v772 = vunpack.c.l.bf16 %v756
  %v773 = vunpack.c.l.bf16 %v757
  %v774 = vunpack.c.l.bf16 %v758
  %v775 = vunpack.c.l.bf16 %v759
  %v776 = vunpack.c.l.bf16 %v760
  %vm777 = vcmask 7168
  %778 = vst.msk [vmem:[%s8] sm:$0xff] %vm777, %v761
  %779 = vst.msk [vmem:[%s8 + $0x8] sm:$0xff] %vm777, %v762
  %780 = vst.msk [vmem:[%s8 + $0x10] sm:$0xff] %vm777, %v763
  %781 = vst.msk [vmem:[%s8 + $0x18] sm:$0xff] %vm777, %v764
  %782 = vst.msk [vmem:[%s8 + $0x20] sm:$0xff] %vm777, %v765
  %783 = vst.msk [vmem:[%s8 + $0x28] sm:$0xff] %vm777, %v766
  %784 = vst.msk [vmem:[%s8 + $0x30] sm:$0xff] %vm777, %v767
  %785 = vst.msk [vmem:[%s8 + $0x38] sm:$0xff] %vm777, %v768
  %786 = vst.msk [vmem:[%s8 + $0x40] sm:$0xff] %vm777, %v769
  %787 = vst.msk [vmem:[%s8 + $0x48] sm:$0xff] %vm777, %v770
  %788 = vst.msk [vmem:[%s8 + $0x50] sm:$0xff] %vm777, %v771
  %789 = vst.msk [vmem:[%s8 + $0x58] sm:$0xff] %vm777, %v772
  %790 = vst.msk [vmem:[%s8 + $0x60] sm:$0xff] %vm777, %v773
  %791 = vst.msk [vmem:[%s8 + $0x68] sm:$0xff] %vm777, %v774
  %792 = vst.msk [vmem:[%s8 + $0x70] sm:$0xff] %vm777, %v775
  %793 = vst.msk [vmem:[%s8 + $0x78] sm:$0xff] %vm777, %v776
  %v794 = vperm.slane %v677, 1
  %vm795 = vcmp.eq.s32.totalorder %v794, 1
  %vm796 = vmpackc.low %vm795, %vm795
  %v797 = vsel %vm796, %v565, 4286578559
  %v798 = vsel %vm796, %v566, 4286578559
  %v799 = vsel %vm796, %v567, 4286578559
  %v800 = vsel %vm796, %v568, 4286578559
  %v801 = vsel %vm796, %v569, 4286578559
  %v802 = vsel %vm796, %v570, 4286578559
  %v803 = vsel %vm796, %v571, 4286578559
  %v804 = vsel %vm796, %v572, 4286578559
  %v805 = vsel %vm796, %v573, 4286578559
  %v806 = vsel %vm796, %v574, 4286578559
  %v807 = vsel %vm796, %v575, 4286578559
  %v808 = vsel %vm796, %v576, 4286578559
  %v809 = vsel %vm796, %v577, 4286578559
  %v810 = vsel %vm796, %v578, 4286578559
  %v811 = vsel %vm796, %v579, 4286578559
  %v812 = vsel %vm796, %v580, 4286578559
  %v813 = vunpack.c.l.bf16 %v797
  %v814 = vunpack.c.l.bf16 %v798
  %v815 = vunpack.c.l.bf16 %v799
  %v816 = vunpack.c.l.bf16 %v800
  %v817 = vunpack.c.l.bf16 %v801
  %v818 = vunpack.c.l.bf16 %v802
  %v819 = vunpack.c.l.bf16 %v803
  %v820 = vunpack.c.l.bf16 %v804
  %v821 = vunpack.c.l.bf16 %v805
  %v822 = vunpack.c.l.bf16 %v806
  %v823 = vunpack.c.l.bf16 %v807
  %v824 = vunpack.c.l.bf16 %v808
  %v825 = vunpack.c.l.bf16 %v809
  %v826 = vunpack.c.l.bf16 %v810
  %v827 = vunpack.c.l.bf16 %v811
  %v828 = vunpack.c.l.bf16 %v812
  %829 = vmax.xlane.f32.xlu0 %v813
  %v830 = vpop.xlane.xlu0 %829
  %831 = vmax.xlane.f32.xlu0 %v814
  %v832 = vpop.xlane.xlu0 %831
  %833 = vmax.xlane.f32.xlu0 %v815
  %v834 = vpop.xlane.xlu0 %833
  %835 = vmax.xlane.f32.xlu0 %v816
  %v836 = vpop.xlane.xlu0 %835
  %837 = vmax.xlane.f32.xlu0 %v817
  %v838 = vpop.xlane.xlu0 %837
  %839 = vmax.xlane.f32.xlu0 %v818
  %v840 = vpop.xlane.xlu0 %839
  %841 = vmax.xlane.f32.xlu0 %v819
  %v842 = vpop.xlane.xlu0 %841
  %843 = vmax.xlane.f32.xlu0 %v820
  %v844 = vpop.xlane.xlu0 %843
  %845 = vmax.xlane.f32.xlu0 %v821
  %v846 = vpop.xlane.xlu0 %845
  %847 = vmax.xlane.f32.xlu0 %v822
  %v848 = vpop.xlane.xlu0 %847
  %849 = vmax.xlane.f32.xlu0 %v823
  %v850 = vpop.xlane.xlu0 %849
  %851 = vmax.xlane.f32.xlu0 %v824
  %v852 = vpop.xlane.xlu0 %851
  %853 = vmax.xlane.f32.xlu0 %v825
  %v854 = vpop.xlane.xlu0 %853
  %855 = vmax.xlane.f32.xlu0 %v826
  %v856 = vpop.xlane.xlu0 %855
  %857 = vmax.xlane.f32.xlu0 %v827
  %v858 = vpop.xlane.xlu0 %857
  %859 = vmax.xlane.f32.xlu0 %v828
  %v860 = vpop.xlane.xlu0 %859
  %v861 = vpack.c.bf16 %v830, %v830
  %v862 = vpack.c.bf16 %v832, %v832
  %v863 = vpack.c.bf16 %v834, %v834
  %v864 = vpack.c.bf16 %v836, %v836
  %v865 = vpack.c.bf16 %v838, %v838
  %v866 = vpack.c.bf16 %v840, %v840
  %v867 = vpack.c.bf16 %v842, %v842
  %v868 = vpack.c.bf16 %v844, %v844
  %v869 = vpack.c.bf16 %v846, %v846
  %v870 = vpack.c.bf16 %v848, %v848
  %v871 = vpack.c.bf16 %v850, %v850
  %v872 = vpack.c.bf16 %v852, %v852
  %v873 = vpack.c.bf16 %v854, %v854
  %v874 = vpack.c.bf16 %v856, %v856
  %v875 = vpack.c.bf16 %v858, %v858
  %v876 = vpack.c.bf16 %v860, %v860
  %v877 = vunpack.c.l.bf16 %v861
  %v878 = vunpack.c.l.bf16 %v862
  %v879 = vunpack.c.l.bf16 %v863
  %v880 = vunpack.c.l.bf16 %v864
  %v881 = vunpack.c.l.bf16 %v865
  %v882 = vunpack.c.l.bf16 %v866
  %v883 = vunpack.c.l.bf16 %v867
  %v884 = vunpack.c.l.bf16 %v868
  %v885 = vunpack.c.l.bf16 %v869
  %v886 = vunpack.c.l.bf16 %v870
  %v887 = vunpack.c.l.bf16 %v871
  %v888 = vunpack.c.l.bf16 %v872
  %v889 = vunpack.c.l.bf16 %v873
  %v890 = vunpack.c.l.bf16 %v874
  %v891 = vunpack.c.l.bf16 %v875
  %v892 = vunpack.c.l.bf16 %v876
  %vm893 = vcmask 15368
  %894 = vst.msk [vmem:[%s8] sm:$0xff] %vm893, %v877
  %895 = vst.msk [vmem:[%s8 + $0x8] sm:$0xff] %vm893, %v878
  %896 = vst.msk [vmem:[%s8 + $0x10] sm:$0xff] %vm893, %v879
  %897 = vst.msk [vmem:[%s8 + $0x18] sm:$0xff] %vm893, %v880
  %898 = vst.msk [vmem:[%s8 + $0x20] sm:$0xff] %vm893, %v881
  %899 = vst.msk [vmem:[%s8 + $0x28] sm:$0xff] %vm893, %v882
  %900 = vst.msk [vmem:[%s8 + $0x30] sm:$0xff] %vm893, %v883
  %901 = vst.msk [vmem:[%s8 + $0x38] sm:$0xff] %vm893, %v884
  %902 = vst.msk [vmem:[%s8 + $0x40] sm:$0xff] %vm893, %v885
  %903 = vst.msk [vmem:[%s8 + $0x48] sm:$0xff] %vm893, %v886
  %904 = vst.msk [vmem:[%s8 + $0x50] sm:$0xff] %vm893, %v887
  %905 = vst.msk [vmem:[%s8 + $0x58] sm:$0xff] %vm893, %v888
  %906 = vst.msk [vmem:[%s8 + $0x60] sm:$0xff] %vm893, %v889
  %907 = vst.msk [vmem:[%s8 + $0x68] sm:$0xff] %vm893, %v890
  %908 = vst.msk [vmem:[%s8 + $0x70] sm:$0xff] %vm893, %v891
  %909 = vst.msk [vmem:[%s8 + $0x78] sm:$0xff] %vm893, %v892
  %v910 = vperm.slane %v677, 2
  %vm911 = vcmp.eq.s32.totalorder %v910, 1
  %vm912 = vmpackc.low %vm911, %vm911
  %v913 = vsel %vm912, %v565, 4286578559
  %v914 = vsel %vm912, %v566, 4286578559
  %v915 = vsel %vm912, %v567, 4286578559
  %v916 = vsel %vm912, %v568, 4286578559
  %v917 = vsel %vm912, %v569, 4286578559
  %v918 = vsel %vm912, %v570, 4286578559
  %v919 = vsel %vm912, %v571, 4286578559
  %v920 = vsel %vm912, %v572, 4286578559
  %v921 = vsel %vm912, %v573, 4286578559
  %v922 = vsel %vm912, %v574, 4286578559
  %v923 = vsel %vm912, %v575, 4286578559
  %v924 = vsel %vm912, %v576, 4286578559
  %v925 = vsel %vm912, %v577, 4286578559
  %v926 = vsel %vm912, %v578, 4286578559
  %v927 = vsel %vm912, %v579, 4286578559
  %v928 = vsel %vm912, %v580, 4286578559
  %v929 = vunpack.c.l.bf16 %v913
  %v930 = vunpack.c.l.bf16 %v914
  %v931 = vunpack.c.l.bf16 %v915
  %v932 = vunpack.c.l.bf16 %v916
  %v933 = vunpack.c.l.bf16 %v917
  %v934 = vunpack.c.l.bf16 %v918
  %v935 = vunpack.c.l.bf16 %v919
  %v936 = vunpack.c.l.bf16 %v920
  %v937 = vunpack.c.l.bf16 %v921
  %v938 = vunpack.c.l.bf16 %v922
  %v939 = vunpack.c.l.bf16 %v923
  %v940 = vunpack.c.l.bf16 %v924
  %v941 = vunpack.c.l.bf16 %v925
  %v942 = vunpack.c.l.bf16 %v926
  %v943 = vunpack.c.l.bf16 %v927
  %v944 = vunpack.c.l.bf16 %v928
  %945 = vmax.xlane.f32.xlu0 %v929
  %v946 = vpop.xlane.xlu0 %945
  %947 = vmax.xlane.f32.xlu0 %v930
  %v948 = vpop.xlane.xlu0 %947
  %949 = vmax.xlane.f32.xlu0 %v931
  %v950 = vpop.xlane.xlu0 %949
  %951 = vmax.xlane.f32.xlu0 %v932
  %v952 = vpop.xlane.xlu0 %951
  %953 = vmax.xlane.f32.xlu0 %v933
  %v954 = vpop.xlane.xlu0 %953
  %955 = vmax.xlane.f32.xlu0 %v934
  %v956 = vpop.xlane.xlu0 %955
  %957 = vmax.xlane.f32.xlu0 %v935
  %v958 = vpop.xlane.xlu0 %957
  %959 = vmax.xlane.f32.xlu0 %v936
  %v960 = vpop.xlane.xlu0 %959
  %961 = vmax.xlane.f32.xlu0 %v937
  %v962 = vpop.xlane.xlu0 %961
  %963 = vmax.xlane.f32.xlu0 %v938
  %v964 = vpop.xlane.xlu0 %963
  %965 = vmax.xlane.f32.xlu0 %v939
  %v966 = vpop.xlane.xlu0 %965
  %967 = vmax.xlane.f32.xlu0 %v940
  %v968 = vpop.xlane.xlu0 %967
  %969 = vmax.xlane.f32.xlu0 %v941
  %v970 = vpop.xlane.xlu0 %969
  %971 = vmax.xlane.f32.xlu0 %v942
  %v972 = vpop.xlane.xlu0 %971
  %973 = vmax.xlane.f32.xlu0 %v943
  %v974 = vpop.xlane.xlu0 %973
  %975 = vmax.xlane.f32.xlu0 %v944
  %v976 = vpop.xlane.xlu0 %975
  %v977 = vpack.c.bf16 %v946, %v946
  %v978 = vpack.c.bf16 %v948, %v948
  %v979 = vpack.c.bf16 %v950, %v950
  %v980 = vpack.c.bf16 %v952, %v952
  %v981 = vpack.c.bf16 %v954, %v954
  %v982 = vpack.c.bf16 %v956, %v956
  %v983 = vpack.c.bf16 %v958, %v958
  %v984 = vpack.c.bf16 %v960, %v960
  %v985 = vpack.c.bf16 %v962, %v962
  %v986 = vpack.c.bf16 %v964, %v964
  %v987 = vpack.c.bf16 %v966, %v966
  %v988 = vpack.c.bf16 %v968, %v968
  %v989 = vpack.c.bf16 %v970, %v970
  %v990 = vpack.c.bf16 %v972, %v972
  %v991 = vpack.c.bf16 %v974, %v974
  %v992 = vpack.c.bf16 %v976, %v976
  %v993 = vunpack.c.l.bf16 %v977
  %v994 = vunpack.c.l.bf16 %v978
  %v995 = vunpack.c.l.bf16 %v979
  %v996 = vunpack.c.l.bf16 %v980
  %v997 = vunpack.c.l.bf16 %v981
  %v998 = vunpack.c.l.bf16 %v982
  %v999 = vunpack.c.l.bf16 %v983
  %v1000 = vunpack.c.l.bf16 %v984
  %v1001 = vunpack.c.l.bf16 %v985
  %v1002 = vunpack.c.l.bf16 %v986
  %v1003 = vunpack.c.l.bf16 %v987
  %v1004 = vunpack.c.l.bf16 %v988
  %v1005 = vunpack.c.l.bf16 %v989
  %v1006 = vunpack.c.l.bf16 %v990
  %v1007 = vunpack.c.l.bf16 %v991
  %v1008 = vunpack.c.l.bf16 %v992
  %vm1009 = vcmask 23568
  %1010 = vst.msk [vmem:[%s8] sm:$0xff] %vm1009, %v993
  %1011 = vst.msk [vmem:[%s8 + $0x8] sm:$0xff] %vm1009, %v994
  %1012 = vst.msk [vmem:[%s8 + $0x10] sm:$0xff] %vm1009, %v995
  %1013 = vst.msk [vmem:[%s8 + $0x18] sm:$0xff] %vm1009, %v996
  %1014 = vst.msk [vmem:[%s8 + $0x20] sm:$0xff] %vm1009, %v997
  %1015 = vst.msk [vmem:[%s8 + $0x28] sm:$0xff] %vm1009, %v998
  %1016 = vst.msk [vmem:[%s8 + $0x30] sm:$0xff] %vm1009, %v999
  %1017 = vst.msk [vmem:[%s8 + $0x38] sm:$0xff] %vm1009, %v1000
  %1018 = vst.msk [vmem:[%s8 + $0x40] sm:$0xff] %vm1009, %v1001
  %1019 = vst.msk [vmem:[%s8 + $0x48] sm:$0xff] %vm1009, %v1002
  %1020 = vst.msk [vmem:[%s8 + $0x50] sm:$0xff] %vm1009, %v1003
  %1021 = vst.msk [vmem:[%s8 + $0x58] sm:$0xff] %vm1009, %v1004
  %1022 = vst.msk [vmem:[%s8 + $0x60] sm:$0xff] %vm1009, %v1005
  %1023 = vst.msk [vmem:[%s8 + $0x68] sm:$0xff] %vm1009, %v1006
  %1024 = vst.msk [vmem:[%s8 + $0x70] sm:$0xff] %vm1009, %v1007
  %1025 = vst.msk [vmem:[%s8 + $0x78] sm:$0xff] %vm1009, %v1008
  %v1026 = vperm.slane %v677, 3
  %vm1027 = vcmp.eq.s32.totalorder %v1026, 1
  %vm1028 = vmpackc.low %vm1027, %vm1027
  %v1029 = vsel %vm1028, %v565, 4286578559
  %v1030 = vsel %vm1028, %v566, 4286578559
  %v1031 = vsel %vm1028, %v567, 4286578559
  %v1032 = vsel %vm1028, %v568, 4286578559
  %v1033 = vsel %vm1028, %v569, 4286578559
  %v1034 = vsel %vm1028, %v570, 4286578559
  %v1035 = vsel %vm1028, %v571, 4286578559
  %v1036 = vsel %vm1028, %v572, 4286578559
  %v1037 = vsel %vm1028, %v573, 4286578559
  %v1038 = vsel %vm1028, %v574, 4286578559
  %v1039 = vsel %vm1028, %v575, 4286578559
  %v1040 = vsel %vm1028, %v576, 4286578559
  %v1041 = vsel %vm1028, %v577, 4286578559
  %v1042 = vsel %vm1028, %v578, 4286578559
  %v1043 = vsel %vm1028, %v579, 4286578559
  %v1044 = vsel %vm1028, %v580, 4286578559
  %v1045 = vunpack.c.l.bf16 %v1029
  %v1046 = vunpack.c.l.bf16 %v1030
  %v1047 = vunpack.c.l.bf16 %v1031
  %v1048 = vunpack.c.l.bf16 %v1032
  %v1049 = vunpack.c.l.bf16 %v1033
  %v1050 = vunpack.c.l.bf16 %v1034
  %v1051 = vunpack.c.l.bf16 %v1035
  %v1052 = vunpack.c.l.bf16 %v1036
  %v1053 = vunpack.c.l.bf16 %v1037
  %v1054 = vunpack.c.l.bf16 %v1038
  %v1055 = vunpack.c.l.bf16 %v1039
  %v1056 = vunpack.c.l.bf16 %v1040
  %v1057 = vunpack.c.l.bf16 %v1041
  %v1058 = vunpack.c.l.bf16 %v1042
  %v1059 = vunpack.c.l.bf16 %v1043
  %v1060 = vunpack.c.l.bf16 %v1044
  %1061 = vmax.xlane.f32.xlu0 %v1045
  %v1062 = vpop.xlane.xlu0 %1061
  %1063 = vmax.xlane.f32.xlu0 %v1046
  %v1064 = vpop.xlane.xlu0 %1063
  %1065 = vmax.xlane.f32.xlu0 %v1047
  %v1066 = vpop.xlane.xlu0 %1065
  %1067 = vmax.xlane.f32.xlu0 %v1048
  %v1068 = vpop.xlane.xlu0 %1067
  %1069 = vmax.xlane.f32.xlu0 %v1049
  %v1070 = vpop.xlane.xlu0 %1069
  %1071 = vmax.xlane.f32.xlu0 %v1050
  %v1072 = vpop.xlane.xlu0 %1071
  %1073 = vmax.xlane.f32.xlu0 %v1051
  %v1074 = vpop.xlane.xlu0 %1073
  %1075 = vmax.xlane.f32.xlu0 %v1052
  %v1076 = vpop.xlane.xlu0 %1075
  %1077 = vmax.xlane.f32.xlu0 %v1053
  %v1078 = vpop.xlane.xlu0 %1077
  %1079 = vmax.xlane.f32.xlu0 %v1054
  %v1080 = vpop.xlane.xlu0 %1079
  %1081 = vmax.xlane.f32.xlu0 %v1055
  %v1082 = vpop.xlane.xlu0 %1081
  %1083 = vmax.xlane.f32.xlu0 %v1056
  %v1084 = vpop.xlane.xlu0 %1083
  %1085 = vmax.xlane.f32.xlu0 %v1057
  %v1086 = vpop.xlane.xlu0 %1085
  %1087 = vmax.xlane.f32.xlu0 %v1058
  %v1088 = vpop.xlane.xlu0 %1087
  %1089 = vmax.xlane.f32.xlu0 %v1059
  %v1090 = vpop.xlane.xlu0 %1089
  %1091 = vmax.xlane.f32.xlu0 %v1060
  %v1092 = vpop.xlane.xlu0 %1091
  %v1093 = vpack.c.bf16 %v1062, %v1062
  %v1094 = vpack.c.bf16 %v1064, %v1064
  %v1095 = vpack.c.bf16 %v1066, %v1066
  %v1096 = vpack.c.bf16 %v1068, %v1068
  %v1097 = vpack.c.bf16 %v1070, %v1070
  %v1098 = vpack.c.bf16 %v1072, %v1072
  %v1099 = vpack.c.bf16 %v1074, %v1074
  %v1100 = vpack.c.bf16 %v1076, %v1076
  %v1101 = vpack.c.bf16 %v1078, %v1078
  %v1102 = vpack.c.bf16 %v1080, %v1080
  %v1103 = vpack.c.bf16 %v1082, %v1082
  %v1104 = vpack.c.bf16 %v1084, %v1084
  %v1105 = vpack.c.bf16 %v1086, %v1086
  %v1106 = vpack.c.bf16 %v1088, %v1088
  %v1107 = vpack.c.bf16 %v1090, %v1090
  %v1108 = vpack.c.bf16 %v1092, %v1092
  %v1109 = vunpack.c.l.bf16 %v1093
  %v1110 = vunpack.c.l.bf16 %v1094
  %v1111 = vunpack.c.l.bf16 %v1095
  %v1112 = vunpack.c.l.bf16 %v1096
  %v1113 = vunpack.c.l.bf16 %v1097
  %v1114 = vunpack.c.l.bf16 %v1098
  %v1115 = vunpack.c.l.bf16 %v1099
  %v1116 = vunpack.c.l.bf16 %v1100
  %v1117 = vunpack.c.l.bf16 %v1101
  %v1118 = vunpack.c.l.bf16 %v1102
  %v1119 = vunpack.c.l.bf16 %v1103
  %v1120 = vunpack.c.l.bf16 %v1104
  %v1121 = vunpack.c.l.bf16 %v1105
  %v1122 = vunpack.c.l.bf16 %v1106
  %v1123 = vunpack.c.l.bf16 %v1107
  %v1124 = vunpack.c.l.bf16 %v1108
  %vm1125 = vcmask 31768
  %1126 = vst.msk [vmem:[%s8] sm:$0xff] %vm1125, %v1109
  %1127 = vst.msk [vmem:[%s8 + $0x8] sm:$0xff] %vm1125, %v1110
  %1128 = vst.msk [vmem:[%s8 + $0x10] sm:$0xff] %vm1125, %v1111
  %1129 = vst.msk [vmem:[%s8 + $0x18] sm:$0xff] %vm1125, %v1112
  %1130 = vst.msk [vmem:[%s8 + $0x20] sm:$0xff] %vm1125, %v1113
  %1131 = vst.msk [vmem:[%s8 + $0x28] sm:$0xff] %vm1125, %v1114
  %1132 = vst.msk [vmem:[%s8 + $0x30] sm:$0xff] %vm1125, %v1115
  %1133 = vst.msk [vmem:[%s8 + $0x38] sm:$0xff] %vm1125, %v1116
  %1134 = vst.msk [vmem:[%s8 + $0x40] sm:$0xff] %vm1125, %v1117
  %1135 = vst.msk [vmem:[%s8 + $0x48] sm:$0xff] %vm1125, %v1118
  %1136 = vst.msk [vmem:[%s8 + $0x50] sm:$0xff] %vm1125, %v1119
  %1137 = vst.msk [vmem:[%s8 + $0x58] sm:$0xff] %vm1125, %v1120
  %1138 = vst.msk [vmem:[%s8 + $0x60] sm:$0xff] %vm1125, %v1121
  %1139 = vst.msk [vmem:[%s8 + $0x68] sm:$0xff] %vm1125, %v1122
  %1140 = vst.msk [vmem:[%s8 + $0x70] sm:$0xff] %vm1125, %v1123
  %1141 = vst.msk [vmem:[%s8 + $0x78] sm:$0xff] %vm1125, %v1124
  %v1142 = vperm.slane %v677, 4
  %vm1143 = vcmp.eq.s32.totalorder %v1142, 1
  %vm1144 = vmpackc.low %vm1143, %vm1143
  %v1145 = vsel %vm1144, %v565, 4286578559
  %v1146 = vsel %vm1144, %v566, 4286578559
  %v1147 = vsel %vm1144, %v567, 4286578559
  %v1148 = vsel %vm1144, %v568, 4286578559
  %v1149 = vsel %vm1144, %v569, 4286578559
  %v1150 = vsel %vm1144, %v570, 4286578559
  %v1151 = vsel %vm1144, %v571, 4286578559
  %v1152 = vsel %vm1144, %v572, 4286578559
  %v1153 = vsel %vm1144, %v573, 4286578559
  %v1154 = vsel %vm1144, %v574, 4286578559
  %v1155 = vsel %vm1144, %v575, 4286578559
  %v1156 = vsel %vm1144, %v576, 4286578559
  %v1157 = vsel %vm1144, %v577, 4286578559
  %v1158 = vsel %vm1144, %v578, 4286578559
  %v1159 = vsel %vm1144, %v579, 4286578559
  %v1160 = vsel %vm1144, %v580, 4286578559
  %v1161 = vunpack.c.l.bf16 %v1145
  %v1162 = vunpack.c.l.bf16 %v1146
  %v1163 = vunpack.c.l.bf16 %v1147
  %v1164 = vunpack.c.l.bf16 %v1148
  %v1165 = vunpack.c.l.bf16 %v1149
  %v1166 = vunpack.c.l.bf16 %v1150
  %v1167 = vunpack.c.l.bf16 %v1151
  %v1168 = vunpack.c.l.bf16 %v1152
  %v1169 = vunpack.c.l.bf16 %v1153
  %v1170 = vunpack.c.l.bf16 %v1154
  %v1171 = vunpack.c.l.bf16 %v1155
  %v1172 = vunpack.c.l.bf16 %v1156
  %v1173 = vunpack.c.l.bf16 %v1157
  %v1174 = vunpack.c.l.bf16 %v1158
  %v1175 = vunpack.c.l.bf16 %v1159
  %v1176 = vunpack.c.l.bf16 %v1160
  %1177 = vmax.xlane.f32.xlu0 %v1161
  %v1178 = vpop.xlane.xlu0 %1177
  %1179 = vmax.xlane.f32.xlu0 %v1162
  %v1180 = vpop.xlane.xlu0 %1179
  %1181 = vmax.xlane.f32.xlu0 %v1163
  %v1182 = vpop.xlane.xlu0 %1181
  %1183 = vmax.xlane.f32.xlu0 %v1164
  %v1184 = vpop.xlane.xlu0 %1183
  %1185 = vmax.xlane.f32.xlu0 %v1165
  %v1186 = vpop.xlane.xlu0 %1185
  %1187 = vmax.xlane.f32.xlu0 %v1166
  %v1188 = vpop.xlane.xlu0 %1187
  %1189 = vmax.xlane.f32.xlu0 %v1167
  %v1190 = vpop.xlane.xlu0 %1189
  %1191 = vmax.xlane.f32.xlu0 %v1168
  %v1192 = vpop.xlane.xlu0 %1191
  %1193 = vmax.xlane.f32.xlu0 %v1169
  %v1194 = vpop.xlane.xlu0 %1193
  %1195 = vmax.xlane.f32.xlu0 %v1170
  %v1196 = vpop.xlane.xlu0 %1195
  %1197 = vmax.xlane.f32.xlu0 %v1171
  %v1198 = vpop.xlane.xlu0 %1197
  %1199 = vmax.xlane.f32.xlu0 %v1172
  %v1200 = vpop.xlane.xlu0 %1199
  %1201 = vmax.xlane.f32.xlu0 %v1173
  %v1202 = vpop.xlane.xlu0 %1201
  %1203 = vmax.xlane.f32.xlu0 %v1174
  %v1204 = vpop.xlane.xlu0 %1203
  %1205 = vmax.xlane.f32.xlu0 %v1175
  %v1206 = vpop.xlane.xlu0 %1205
  %1207 = vmax.xlane.f32.xlu0 %v1176
  %v1208 = vpop.xlane.xlu0 %1207
  %v1209 = vpack.c.bf16 %v1178, %v1178
  %v1210 = vpack.c.bf16 %v1180, %v1180
  %v1211 = vpack.c.bf16 %v1182, %v1182
  %v1212 = vpack.c.bf16 %v1184, %v1184
  %v1213 = vpack.c.bf16 %v1186, %v1186
  %v1214 = vpack.c.bf16 %v1188, %v1188
  %v1215 = vpack.c.bf16 %v1190, %v1190
  %v1216 = vpack.c.bf16 %v1192, %v1192
  %v1217 = vpack.c.bf16 %v1194, %v1194
  %v1218 = vpack.c.bf16 %v1196, %v1196
  %v1219 = vpack.c.bf16 %v1198, %v1198
  %v1220 = vpack.c.bf16 %v1200, %v1200
  %v1221 = vpack.c.bf16 %v1202, %v1202
  %v1222 = vpack.c.bf16 %v1204, %v1204
  %v1223 = vpack.c.bf16 %v1206, %v1206
  %v1224 = vpack.c.bf16 %v1208, %v1208
  %v1225 = vunpack.c.l.bf16 %v1209
  %v1226 = vunpack.c.l.bf16 %v1210
  %v1227 = vunpack.c.l.bf16 %v1211
  %v1228 = vunpack.c.l.bf16 %v1212
  %v1229 = vunpack.c.l.bf16 %v1213
  %v1230 = vunpack.c.l.bf16 %v1214
  %v1231 = vunpack.c.l.bf16 %v1215
  %v1232 = vunpack.c.l.bf16 %v1216
  %v1233 = vunpack.c.l.bf16 %v1217
  %v1234 = vunpack.c.l.bf16 %v1218
  %v1235 = vunpack.c.l.bf16 %v1219
  %v1236 = vunpack.c.l.bf16 %v1220
  %v1237 = vunpack.c.l.bf16 %v1221
  %v1238 = vunpack.c.l.bf16 %v1222
  %v1239 = vunpack.c.l.bf16 %v1223
  %v1240 = vunpack.c.l.bf16 %v1224
  %vm1241 = vcmask 39968
  %1242 = vst.msk [vmem:[%s8] sm:$0xff] %vm1241, %v1225
  %1243 = vst.msk [vmem:[%s8 + $0x8] sm:$0xff] %vm1241, %v1226
  %1244 = vst.msk [vmem:[%s8 + $0x10] sm:$0xff] %vm1241, %v1227
  %1245 = vst.msk [vmem:[%s8 + $0x18] sm:$0xff] %vm1241, %v1228
  %1246 = vst.msk [vmem:[%s8 + $0x20] sm:$0xff] %vm1241, %v1229
  %1247 = vst.msk [vmem:[%s8 + $0x28] sm:$0xff] %vm1241, %v1230
  %1248 = vst.msk [vmem:[%s8 + $0x30] sm:$0xff] %vm1241, %v1231
  %1249 = vst.msk [vmem:[%s8 + $0x38] sm:$0xff] %vm1241, %v1232
  %1250 = vst.msk [vmem:[%s8 + $0x40] sm:$0xff] %vm1241, %v1233
  %1251 = vst.msk [vmem:[%s8 + $0x48] sm:$0xff] %vm1241, %v1234
  %1252 = vst.msk [vmem:[%s8 + $0x50] sm:$0xff] %vm1241, %v1235
  %1253 = vst.msk [vmem:[%s8 + $0x58] sm:$0xff] %vm1241, %v1236
  %1254 = vst.msk [vmem:[%s8 + $0x60] sm:$0xff] %vm1241, %v1237
  %1255 = vst.msk [vmem:[%s8 + $0x68] sm:$0xff] %vm1241, %v1238
  %1256 = vst.msk [vmem:[%s8 + $0x70] sm:$0xff] %vm1241, %v1239
  %1257 = vst.msk [vmem:[%s8 + $0x78] sm:$0xff] %vm1241, %v1240
  %v1258 = vperm.slane %v677, 5
  %vm1259 = vcmp.eq.s32.totalorder %v1258, 1
  %vm1260 = vmpackc.low %vm1259, %vm1259
  %v1261 = vsel %vm1260, %v565, 4286578559
  %v1262 = vsel %vm1260, %v566, 4286578559
  %v1263 = vsel %vm1260, %v567, 4286578559
  %v1264 = vsel %vm1260, %v568, 4286578559
  %v1265 = vsel %vm1260, %v569, 4286578559
  %v1266 = vsel %vm1260, %v570, 4286578559
  %v1267 = vsel %vm1260, %v571, 4286578559
  %v1268 = vsel %vm1260, %v572, 4286578559
  %v1269 = vsel %vm1260, %v573, 4286578559
  %v1270 = vsel %vm1260, %v574, 4286578559
  %v1271 = vsel %vm1260, %v575, 4286578559
  %v1272 = vsel %vm1260, %v576, 4286578559
  %v1273 = vsel %vm1260, %v577, 4286578559
  %v1274 = vsel %vm1260, %v578, 4286578559
  %v1275 = vsel %vm1260, %v579, 4286578559
  %v1276 = vsel %vm1260, %v580, 4286578559
  %v1277 = vunpack.c.l.bf16 %v1261
  %v1278 = vunpack.c.l.bf16 %v1262
  %v1279 = vunpack.c.l.bf16 %v1263
  %v1280 = vunpack.c.l.bf16 %v1264
  %v1281 = vunpack.c.l.bf16 %v1265
  %v1282 = vunpack.c.l.bf16 %v1266
  %v1283 = vunpack.c.l.bf16 %v1267
  %v1284 = vunpack.c.l.bf16 %v1268
  %v1285 = vunpack.c.l.bf16 %v1269
  %v1286 = vunpack.c.l.bf16 %v1270
  %v1287 = vunpack.c.l.bf16 %v1271
  %v1288 = vunpack.c.l.bf16 %v1272
  %v1289 = vunpack.c.l.bf16 %v1273
  %v1290 = vunpack.c.l.bf16 %v1274
  %v1291 = vunpack.c.l.bf16 %v1275
  %v1292 = vunpack.c.l.bf16 %v1276
  %1293 = vmax.xlane.f32.xlu0 %v1277
  %v1294 = vpop.xlane.xlu0 %1293
  %1295 = vmax.xlane.f32.xlu0 %v1278
  %v1296 = vpop.xlane.xlu0 %1295
  %1297 = vmax.xlane.f32.xlu0 %v1279
  %v1298 = vpop.xlane.xlu0 %1297
  %1299 = vmax.xlane.f32.xlu0 %v1280
  %v1300 = vpop.xlane.xlu0 %1299
  %1301 = vmax.xlane.f32.xlu0 %v1281
  %v1302 = vpop.xlane.xlu0 %1301
  %1303 = vmax.xlane.f32.xlu0 %v1282
  %v1304 = vpop.xlane.xlu0 %1303
  %1305 = vmax.xlane.f32.xlu0 %v1283
  %v1306 = vpop.xlane.xlu0 %1305
  %1307 = vmax.xlane.f32.xlu0 %v1284
  %v1308 = vpop.xlane.xlu0 %1307
  %1309 = vmax.xlane.f32.xlu0 %v1285
  %v1310 = vpop.xlane.xlu0 %1309
  %1311 = vmax.xlane.f32.xlu0 %v1286
  %v1312 = vpop.xlane.xlu0 %1311
  %1313 = vmax.xlane.f32.xlu0 %v1287
  %v1314 = vpop.xlane.xlu0 %1313
  %1315 = vmax.xlane.f32.xlu0 %v1288
  %v1316 = vpop.xlane.xlu0 %1315
  %1317 = vmax.xlane.f32.xlu0 %v1289
  %v1318 = vpop.xlane.xlu0 %1317
  %1319 = vmax.xlane.f32.xlu0 %v1290
  %v1320 = vpop.xlane.xlu0 %1319
  %1321 = vmax.xlane.f32.xlu0 %v1291
  %v1322 = vpop.xlane.xlu0 %1321
  %1323 = vmax.xlane.f32.xlu0 %v1292
  %v1324 = vpop.xlane.xlu0 %1323
  %v1325 = vpack.c.bf16 %v1294, %v1294
  %v1326 = vpack.c.bf16 %v1296, %v1296
  %v1327 = vpack.c.bf16 %v1298, %v1298
  %v1328 = vpack.c.bf16 %v1300, %v1300
  %v1329 = vpack.c.bf16 %v1302, %v1302
  %v1330 = vpack.c.bf16 %v1304, %v1304
  %v1331 = vpack.c.bf16 %v1306, %v1306
  %v1332 = vpack.c.bf16 %v1308, %v1308
  %v1333 = vpack.c.bf16 %v1310, %v1310
  %v1334 = vpack.c.bf16 %v1312, %v1312
  %v1335 = vpack.c.bf16 %v1314, %v1314
  %v1336 = vpack.c.bf16 %v1316, %v1316
  %v1337 = vpack.c.bf16 %v1318, %v1318
  %v1338 = vpack.c.bf16 %v1320, %v1320
  %v1339 = vpack.c.bf16 %v1322, %v1322
  %v1340 = vpack.c.bf16 %v1324, %v1324
  %v1341 = vunpack.c.l.bf16 %v1325
  %v1342 = vunpack.c.l.bf16 %v1326
  %v1343 = vunpack.c.l.bf16 %v1327
  %v1344 = vunpack.c.l.bf16 %v1328
  %v1345 = vunpack.c.l.bf16 %v1329
  %v1346 = vunpack.c.l.bf16 %v1330
  %v1347 = vunpack.c.l.bf16 %v1331
  %v1348 = vunpack.c.l.bf16 %v1332
  %v1349 = vunpack.c.l.bf16 %v1333
  %v1350 = vunpack.c.l.bf16 %v1334
  %v1351 = vunpack.c.l.bf16 %v1335
  %v1352 = vunpack.c.l.bf16 %v1336
  %v1353 = vunpack.c.l.bf16 %v1337
  %v1354 = vunpack.c.l.bf16 %v1338
  %v1355 = vunpack.c.l.bf16 %v1339
  %v1356 = vunpack.c.l.bf16 %v1340
  %vm1357 = vcmask 48168
  %1358 = vst.msk [vmem:[%s8] sm:$0xff] %vm1357, %v1341
  %1359 = vst.msk [vmem:[%s8 + $0x8] sm:$0xff] %vm1357, %v1342
  %1360 = vst.msk [vmem:[%s8 + $0x10] sm:$0xff] %vm1357, %v1343
  %1361 = vst.msk [vmem:[%s8 + $0x18] sm:$0xff] %vm1357, %v1344
  %1362 = vst.msk [vmem:[%s8 + $0x20] sm:$0xff] %vm1357, %v1345
  %1363 = vst.msk [vmem:[%s8 + $0x28] sm:$0xff] %vm1357, %v1346
  %1364 = vst.msk [vmem:[%s8 + $0x30] sm:$0xff] %vm1357, %v1347
  %1365 = vst.msk [vmem:[%s8 + $0x38] sm:$0xff] %vm1357, %v1348
  %1366 = vst.msk [vmem:[%s8 + $0x40] sm:$0xff] %vm1357, %v1349
  %1367 = vst.msk [vmem:[%s8 + $0x48] sm:$0xff] %vm1357, %v1350
  %1368 = vst.msk [vmem:[%s8 + $0x50] sm:$0xff] %vm1357, %v1351
  %1369 = vst.msk [vmem:[%s8 + $0x58] sm:$0xff] %vm1357, %v1352
  %1370 = vst.msk [vmem:[%s8 + $0x60] sm:$0xff] %vm1357, %v1353
  %1371 = vst.msk [vmem:[%s8 + $0x68] sm:$0xff] %vm1357, %v1354
  %1372 = vst.msk [vmem:[%s8 + $0x70] sm:$0xff] %vm1357, %v1355
  %1373 = vst.msk [vmem:[%s8 + $0x78] sm:$0xff] %vm1357, %v1356
  %v1374 = vperm.slane %v677, 6
  %vm1375 = vcmp.eq.s32.totalorder %v1374, 1
  %vm1376 = vmpackc.low %vm1375, %vm1375
  %v1377 = vsel %vm1376, %v565, 4286578559
  %v1378 = vsel %vm1376, %v566, 4286578559
  %v1379 = vsel %vm1376, %v567, 4286578559
  %v1380 = vsel %vm1376, %v568, 4286578559
  %v1381 = vsel %vm1376, %v569, 4286578559
  %v1382 = vsel %vm1376, %v570, 4286578559
  %v1383 = vsel %vm1376, %v571, 4286578559
  %v1384 = vsel %vm1376, %v572, 4286578559
  %v1385 = vsel %vm1376, %v573, 4286578559
  %v1386 = vsel %vm1376, %v574, 4286578559
  %v1387 = vsel %vm1376, %v575, 4286578559
  %v1388 = vsel %vm1376, %v576, 4286578559
  %v1389 = vsel %vm1376, %v577, 4286578559
  %v1390 = vsel %vm1376, %v578, 4286578559
  %v1391 = vsel %vm1376, %v579, 4286578559
  %v1392 = vsel %vm1376, %v580, 4286578559
  %v1393 = vunpack.c.l.bf16 %v1377
  %v1394 = vunpack.c.l.bf16 %v1378
  %v1395 = vunpack.c.l.bf16 %v1379
  %v1396 = vunpack.c.l.bf16 %v1380
  %v1397 = vunpack.c.l.bf16 %v1381
  %v1398 = vunpack.c.l.bf16 %v1382
  %v1399 = vunpack.c.l.bf16 %v1383
  %v1400 = vunpack.c.l.bf16 %v1384
  %v1401 = vunpack.c.l.bf16 %v1385
  %v1402 = vunpack.c.l.bf16 %v1386
  %v1403 = vunpack.c.l.bf16 %v1387
  %v1404 = vunpack.c.l.bf16 %v1388
  %v1405 = vunpack.c.l.bf16 %v1389
  %v1406 = vunpack.c.l.bf16 %v1390
  %v1407 = vunpack.c.l.bf16 %v1391
  %v1408 = vunpack.c.l.bf16 %v1392
  %1409 = vmax.xlane.f32.xlu0 %v1393
  %v1410 = vpop.xlane.xlu0 %1409
  %1411 = vmax.xlane.f32.xlu0 %v1394
  %v1412 = vpop.xlane.xlu0 %1411
  %1413 = vmax.xlane.f32.xlu0 %v1395
  %v1414 = vpop.xlane.xlu0 %1413
  %1415 = vmax.xlane.f32.xlu0 %v1396
  %v1416 = vpop.xlane.xlu0 %1415
  %1417 = vmax.xlane.f32.xlu0 %v1397
  %v1418 = vpop.xlane.xlu0 %1417
  %1419 = vmax.xlane.f32.xlu0 %v1398
  %v1420 = vpop.xlane.xlu0 %1419
  %1421 = vmax.xlane.f32.xlu0 %v1399
  %v1422 = vpop.xlane.xlu0 %1421
  %1423 = vmax.xlane.f32.xlu0 %v1400
  %v1424 = vpop.xlane.xlu0 %1423
  %1425 = vmax.xlane.f32.xlu0 %v1401
  %v1426 = vpop.xlane.xlu0 %1425
  %1427 = vmax.xlane.f32.xlu0 %v1402
  %v1428 = vpop.xlane.xlu0 %1427
  %1429 = vmax.xlane.f32.xlu0 %v1403
  %v1430 = vpop.xlane.xlu0 %1429
  %1431 = vmax.xlane.f32.xlu0 %v1404
  %v1432 = vpop.xlane.xlu0 %1431
  %1433 = vmax.xlane.f32.xlu0 %v1405
  %v1434 = vpop.xlane.xlu0 %1433
  %1435 = vmax.xlane.f32.xlu0 %v1406
  %v1436 = vpop.xlane.xlu0 %1435
  %1437 = vmax.xlane.f32.xlu0 %v1407
  %v1438 = vpop.xlane.xlu0 %1437
  %1439 = vmax.xlane.f32.xlu0 %v1408
  %v1440 = vpop.xlane.xlu0 %1439
  %v1441 = vpack.c.bf16 %v1410, %v1410
  %v1442 = vpack.c.bf16 %v1412, %v1412
  %v1443 = vpack.c.bf16 %v1414, %v1414
  %v1444 = vpack.c.bf16 %v1416, %v1416
  %v1445 = vpack.c.bf16 %v1418, %v1418
  %v1446 = vpack.c.bf16 %v1420, %v1420
  %v1447 = vpack.c.bf16 %v1422, %v1422
  %v1448 = vpack.c.bf16 %v1424, %v1424
  %v1449 = vpack.c.bf16 %v1426, %v1426
  %v1450 = vpack.c.bf16 %v1428, %v1428
  %v1451 = vpack.c.bf16 %v1430, %v1430
  %v1452 = vpack.c.bf16 %v1432, %v1432
  %v1453 = vpack.c.bf16 %v1434, %v1434
  %v1454 = vpack.c.bf16 %v1436, %v1436
  %v1455 = vpack.c.bf16 %v1438, %v1438
  %v1456 = vpack.c.bf16 %v1440, %v1440
  %v1457 = vunpack.c.l.bf16 %v1441
  %v1458 = vunpack.c.l.bf16 %v1442
  %v1459 = vunpack.c.l.bf16 %v1443
  %v1460 = vunpack.c.l.bf16 %v1444
  %v1461 = vunpack.c.l.bf16 %v1445
  %v1462 = vunpack.c.l.bf16 %v1446
  %v1463 = vunpack.c.l.bf16 %v1447
  %v1464 = vunpack.c.l.bf16 %v1448
  %v1465 = vunpack.c.l.bf16 %v1449
  %v1466 = vunpack.c.l.bf16 %v1450
  %v1467 = vunpack.c.l.bf16 %v1451
  %v1468 = vunpack.c.l.bf16 %v1452
  %v1469 = vunpack.c.l.bf16 %v1453
  %v1470 = vunpack.c.l.bf16 %v1454
  %v1471 = vunpack.c.l.bf16 %v1455
  %v1472 = vunpack.c.l.bf16 %v1456
  %vm1473 = vcmask 56368
  %1474 = vst.msk [vmem:[%s8] sm:$0xff] %vm1473, %v1457
  %1475 = vst.msk [vmem:[%s8 + $0x8] sm:$0xff] %vm1473, %v1458
  %1476 = vst.msk [vmem:[%s8 + $0x10] sm:$0xff] %vm1473, %v1459
  %1477 = vst.msk [vmem:[%s8 + $0x18] sm:$0xff] %vm1473, %v1460
  %1478 = vst.msk [vmem:[%s8 + $0x20] sm:$0xff] %vm1473, %v1461
  %1479 = vst.msk [vmem:[%s8 + $0x28] sm:$0xff] %vm1473, %v1462
  %1480 = vst.msk [vmem:[%s8 + $0x30] sm:$0xff] %vm1473, %v1463
  %1481 = vst.msk [vmem:[%s8 + $0x38] sm:$0xff] %vm1473, %v1464
  %1482 = vst.msk [vmem:[%s8 + $0x40] sm:$0xff] %vm1473, %v1465
  %1483 = vst.msk [vmem:[%s8 + $0x48] sm:$0xff] %vm1473, %v1466
  %1484 = vst.msk [vmem:[%s8 + $0x50] sm:$0xff] %vm1473, %v1467
  %1485 = vst.msk [vmem:[%s8 + $0x58] sm:$0xff] %vm1473, %v1468
  %1486 = vst.msk [vmem:[%s8 + $0x60] sm:$0xff] %vm1473, %v1469
  %1487 = vst.msk [vmem:[%s8 + $0x68] sm:$0xff] %vm1473, %v1470
  %1488 = vst.msk [vmem:[%s8 + $0x70] sm:$0xff] %vm1473, %v1471
  %1489 = vst.msk [vmem:[%s8 + $0x78] sm:$0xff] %vm1473, %v1472
  %v1490 = vperm.slane %v677, 7
  %vm1491 = vcmp.eq.s32.totalorder %v1490, 1
  %vm1492 = vmpackc.low %vm1491, %vm1491
  %v1493 = vsel %vm1492, %v565, 4286578559
  %v1494 = vsel %vm1492, %v566, 4286578559
  %v1495 = vsel %vm1492, %v567, 4286578559
  %v1496 = vsel %vm1492, %v568, 4286578559
  %v1497 = vsel %vm1492, %v569, 4286578559
  %v1498 = vsel %vm1492, %v570, 4286578559
  %v1499 = vsel %vm1492, %v571, 4286578559
  %v1500 = vsel %vm1492, %v572, 4286578559
  %v1501 = vsel %vm1492, %v573, 4286578559
  %v1502 = vsel %vm1492, %v574, 4286578559
  %v1503 = vsel %vm1492, %v575, 4286578559
  %v1504 = vsel %vm1492, %v576, 4286578559
  %v1505 = vsel %vm1492, %v577, 4286578559
  %v1506 = vsel %vm1492, %v578, 4286578559
  %v1507 = vsel %vm1492, %v579, 4286578559
  %v1508 = vsel %vm1492, %v580, 4286578559
  %v1509 = vunpack.c.l.bf16 %v1493
  %v1510 = vunpack.c.l.bf16 %v1494
  %v1511 = vunpack.c.l.bf16 %v1495
  %v1512 = vunpack.c.l.bf16 %v1496
  %v1513 = vunpack.c.l.bf16 %v1497
  %v1514 = vunpack.c.l.bf16 %v1498
  %v1515 = vunpack.c.l.bf16 %v1499
  %v1516 = vunpack.c.l.bf16 %v1500
  %v1517 = vunpack.c.l.bf16 %v1501
  %v1518 = vunpack.c.l.bf16 %v1502
  %v1519 = vunpack.c.l.bf16 %v1503
  %v1520 = vunpack.c.l.bf16 %v1504
  %v1521 = vunpack.c.l.bf16 %v1505
  %v1522 = vunpack.c.l.bf16 %v1506
  %v1523 = vunpack.c.l.bf16 %v1507
  %v1524 = vunpack.c.l.bf16 %v1508
  %1525 = vmax.xlane.f32.xlu0 %v1509
  %v1526 = vpop.xlane.xlu0 %1525
  %1527 = vmax.xlane.f32.xlu0 %v1510
  %v1528 = vpop.xlane.xlu0 %1527
  %1529 = vmax.xlane.f32.xlu0 %v1511
  %v1530 = vpop.xlane.xlu0 %1529
  %1531 = vmax.xlane.f32.xlu0 %v1512
  %v1532 = vpop.xlane.xlu0 %1531
  %1533 = vmax.xlane.f32.xlu0 %v1513
  %v1534 = vpop.xlane.xlu0 %1533
  %1535 = vmax.xlane.f32.xlu0 %v1514
  %v1536 = vpop.xlane.xlu0 %1535
  %1537 = vmax.xlane.f32.xlu0 %v1515
  %v1538 = vpop.xlane.xlu0 %1537
  %1539 = vmax.xlane.f32.xlu0 %v1516
  %v1540 = vpop.xlane.xlu0 %1539
  %1541 = vmax.xlane.f32.xlu0 %v1517
  %v1542 = vpop.xlane.xlu0 %1541
  %1543 = vmax.xlane.f32.xlu0 %v1518
  %v1544 = vpop.xlane.xlu0 %1543
  %1545 = vmax.xlane.f32.xlu0 %v1519
  %v1546 = vpop.xlane.xlu0 %1545
  %1547 = vmax.xlane.f32.xlu0 %v1520
  %v1548 = vpop.xlane.xlu0 %1547
  %1549 = vmax.xlane.f32.xlu0 %v1521
  %v1550 = vpop.xlane.xlu0 %1549
  %1551 = vmax.xlane.f32.xlu0 %v1522
  %v1552 = vpop.xlane.xlu0 %1551
  %1553 = vmax.xlane.f32.xlu0 %v1523
  %v1554 = vpop.xlane.xlu0 %1553
  %1555 = vmax.xlane.f32.xlu0 %v1524
  %v1556 = vpop.xlane.xlu0 %1555
  %v1557 = vpack.c.bf16 %v1526, %v1526
  %v1558 = vpack.c.bf16 %v1528, %v1528
  %v1559 = vpack.c.bf16 %v1530, %v1530
  %v1560 = vpack.c.bf16 %v1532, %v1532
  %v1561 = vpack.c.bf16 %v1534, %v1534
  %v1562 = vpack.c.bf16 %v1536, %v1536
  %v1563 = vpack.c.bf16 %v1538, %v1538
  %v1564 = vpack.c.bf16 %v1540, %v1540
  %v1565 = vpack.c.bf16 %v1542, %v1542
  %v1566 = vpack.c.bf16 %v1544, %v1544
  %v1567 = vpack.c.bf16 %v1546, %v1546
  %v1568 = vpack.c.bf16 %v1548, %v1548
  %v1569 = vpack.c.bf16 %v1550, %v1550
  %v1570 = vpack.c.bf16 %v1552, %v1552
  %v1571 = vpack.c.bf16 %v1554, %v1554
  %v1572 = vpack.c.bf16 %v1556, %v1556
  %v1573 = vunpack.c.l.bf16 %v1557
  %v1574 = vunpack.c.l.bf16 %v1558
  %v1575 = vunpack.c.l.bf16 %v1559
  %v1576 = vunpack.c.l.bf16 %v1560
  %v1577 = vunpack.c.l.bf16 %v1561
  %v1578 = vunpack.c.l.bf16 %v1562
  %v1579 = vunpack.c.l.bf16 %v1563
  %v1580 = vunpack.c.l.bf16 %v1564
  %v1581 = vunpack.c.l.bf16 %v1565
  %v1582 = vunpack.c.l.bf16 %v1566
  %v1583 = vunpack.c.l.bf16 %v1567
  %v1584 = vunpack.c.l.bf16 %v1568
  %v1585 = vunpack.c.l.bf16 %v1569
  %v1586 = vunpack.c.l.bf16 %v1570
  %v1587 = vunpack.c.l.bf16 %v1571
  %v1588 = vunpack.c.l.bf16 %v1572
  %vm1589 = vcmask 64568
  %1590 = vst.msk [vmem:[%s8] sm:$0xff] %vm1589, %v1573
  %1591 = vst.msk [vmem:[%s8 + $0x8] sm:$0xff] %vm1589, %v1574
  %1592 = vst.msk [vmem:[%s8 + $0x10] sm:$0xff] %vm1589, %v1575
  %1593 = vst.msk [vmem:[%s8 + $0x18] sm:$0xff] %vm1589, %v1576
  %1594 = vst.msk [vmem:[%s8 + $0x20] sm:$0xff] %vm1589, %v1577
  %1595 = vst.msk [vmem:[%s8 + $0x28] sm:$0xff] %vm1589, %v1578
  %1596 = vst.msk [vmem:[%s8 + $0x30] sm:$0xff] %vm1589, %v1579
  %1597 = vst.msk [vmem:[%s8 + $0x38] sm:$0xff] %vm1589, %v1580
  %1598 = vst.msk [vmem:[%s8 + $0x40] sm:$0xff] %vm1589, %v1581
  %1599 = vst.msk [vmem:[%s8 + $0x48] sm:$0xff] %vm1589, %v1582
  %1600 = vst.msk [vmem:[%s8 + $0x50] sm:$0xff] %vm1589, %v1583
  %1601 = vst.msk [vmem:[%s8 + $0x58] sm:$0xff] %vm1589, %v1584
  %1602 = vst.msk [vmem:[%s8 + $0x60] sm:$0xff] %vm1589, %v1585
  %1603 = vst.msk [vmem:[%s8 + $0x68] sm:$0xff] %vm1589, %v1586
  %1604 = vst.msk [vmem:[%s8 + $0x70] sm:$0xff] %vm1589, %v1587
  %1605 = vst.msk [vmem:[%s8 + $0x78] sm:$0xff] %vm1589, %v1588
  // Predicated region
  $region34: #{untrained_gcn_forward.1} parent=0 // pred_check
    _
  $region35: #{untrained_gcn_forward.1} parent=0 // pred_check_branch
    %1607 = sbr.rel (0) target = $region37
  $region36: #{untrained_gcn_forward.1} parent=0 // pred_region
    _
  $region37: #{untrained_gcn_forward.1} parent=0 // pred_fallthru
    _
  // Predicated region
  $region38: #{untrained_gcn_forward.1} parent=0 // pred_check
    _
  $region39: #{untrained_gcn_forward.1} parent=0 // pred_check_branch
    %1609 = sbr.rel (0) target = $region41
  $region40: #{untrained_gcn_forward.1} parent=0 // pred_region
    _
  $region41: #{untrained_gcn_forward.1} parent=0 // pred_fallthru
    _
  // Predicated region
  $region42: #{untrained_gcn_forward.1} parent=0 // pred_check
    _
  $region43: #{untrained_gcn_forward.1} parent=0 // pred_check_branch
    %1611 = sbr.rel (0) target = $region45
  $region44: #{untrained_gcn_forward.1} parent=0 // pred_region
    _
  $region45: #{untrained_gcn_forward.1} parent=0 // pred_fallthru
    _
  // Predicated region
  $region46: #{untrained_gcn_forward.1} parent=0 // pred_check
    _
  $region47: #{untrained_gcn_forward.1} parent=0 // pred_check_branch
    %1613 = sbr.rel (0) target = $region49
  $region48: #{untrained_gcn_forward.1} parent=0 // pred_region
    _
  $region49: #{untrained_gcn_forward.1} parent=0 // pred_fallthru
    _

</llo_original>
